<compile_context>
chip_gen: v7x
topology: tpu7x:2x2x1
jax: 0.10.0
libtpu: 0.0.40
codegen_flags: <defaults>
</compile_context>

<pallas_src>
import numpy as np
import jax
import jax.numpy as jnp
from jax import lax
from jax.experimental import pallas as pl
from jax.experimental.pallas import tpu as pltpu

TARGET = 224  # ViTFeatureExtractor size for vit-base-patch16-224-in21k
IMAGE_MEAN = 0.5
IMAGE_STD = 0.5
RESCALE = 1.0 / 255.0
_SCALE = RESCALE / IMAGE_STD     # multiplicative part of rescale+normalize
_SHIFT = IMAGE_MEAN / IMAGE_STD  # additive part of normalize

_VMEM_LIMIT_BYTES = 48 * 1024 * 1024   # safe on v7x (64 MiB) and v5e/v6e (128 MiB)
_VMEM_BLOCK_BUDGET = 36 * 1024 * 1024  # headroom below the scoped limit
_MAX_PLANES_PER_STEP = 64


def _bilinear_matrix(out_size: int, in_size: int) -> np.ndarray:
    """Half-pixel (align_corners=False) bilinear interpolation matrix."""
    o = np.arange(out_size, dtype=np.float64)
    src = (o + 0.5) * in_size / out_size - 0.5
    lo = np.floor(src).astype(np.int64)
    frac = src - lo
    lo0 = np.clip(lo, 0, in_size - 1)
    lo1 = np.clip(lo + 1, 0, in_size - 1)
    m = np.zeros((out_size, in_size), dtype=np.float32)
    rows = np.arange(out_size)
    np.add.at(m, (rows, lo0), (1.0 - frac).astype(np.float32))
    np.add.at(m, (rows, lo1), frac.astype(np.float32))
    return m


def _largest_divisor_fitting(n_planes: int, per_plane_bytes: int,
                             fixed_bytes: int) -> int:
    """Largest P <= cap dividing n_planes whose working set fits the budget."""
    best = 1
    for p in range(1, min(n_planes, _MAX_PLANES_PER_STEP) + 1):
        if n_planes % p:
            continue
        if p * per_plane_bytes + fixed_bytes <= _VMEM_BLOCK_BUDGET:
            best = p
    return best


def _resize_normalize_kernel(ry_ref, rxt_ref, img_ref, out_ref):
    # ry_ref : (224, H)   row-resize matrix, (rescale/std) already folded in
    # rxt_ref: (W, 224)   column-resize matrix, transposed
    # img_ref: (P, H, W)  P image planes (one (batch, channel) each)
    # out_ref: (P, 224, 224)
    p, h, w = img_ref.shape
    imgs = img_ref[...].astype(jnp.float32).reshape(p * h, w)

    # Column resize: one big MXU matmul (P*H, W) @ (W, 224) -> (P*H, 224).
    tmp = jnp.dot(imgs, rxt_ref[...], preferred_element_type=jnp.float32)
    tmp = tmp.reshape(p, h, TARGET)

    # Row resize: batched matmul (P, 224, H) @ (P, H, 224) -> (P, 224, 224).
    ry_b = jnp.broadcast_to(ry_ref[...], (p, TARGET, h))
    resized = lax.dot_general(
        ry_b, tmp,
        dimension_numbers=(((2,), (1,)), ((0,), (0,))),
        preferred_element_type=jnp.float32)

    # Scale was folded into Ry; only the additive shift remains (single vsub).
    out_ref[...] = resized - _SHIFT


def _normalize_only_kernel(img_ref, out_ref):
    # Input already 224x224: resize is the identity -> pure VPU scale+shift.
    out_ref[...] = img_ref[...].astype(jnp.float32) * _SCALE - _SHIFT


def model_pretext_transformers_forward(x: jax.Array) -> jax.Array:
    """Pallas implementation of modelPretextTransformers.forward.

    x: (B, C, H, W), pixel values in [0, 255] (float32 or uint8).
    returns: (B, C, 224, 224) float32 `pixel_values`.
    """
    B, C, H, W = x.shape
    n_planes = B * C
    x_flat = x.reshape(n_planes, H, W)   # dtype passed through; cast in kernel
    in_itemsize = jnp.dtype(x.dtype).itemsize

    if H == TARGET and W == TARGET:
        # Fast path: no resize needed, memory-bound elementwise normalize.
        per_plane = (2 * TARGET * TARGET * in_itemsize   # double-buffered input
                     + 2 * TARGET * TARGET * 4)          # double-buffered output
        P = _largest_divisor_fitting(n_planes, per_plane, 0)
        out_flat = pl.pallas_call(
            _normalize_only_kernel,
            out_shape=jax.ShapeDtypeStruct((n_planes, TARGET, TARGET), jnp.float32),
            grid_spec=pltpu.PrefetchScalarGridSpec(
                num_scalar_prefetch=0,
                grid=(n_planes // P,),
                in_specs=[pl.BlockSpec((P, TARGET, TARGET), lambda i: (i, 0, 0))],
                out_specs=pl.BlockSpec((P, TARGET, TARGET), lambda i: (i, 0, 0)),
            ),
            compiler_params=pltpu.CompilerParams(
                dimension_semantics=("parallel",),
                vmem_limit_bytes=_VMEM_LIMIT_BYTES),
            cost_estimate=pl.CostEstimate(
                flops=2 * n_planes * TARGET * TARGET,
                transcendentals=0,
                bytes_accessed=(x_flat.size * in_itemsize
                                + n_planes * TARGET * TARGET * 4)),
        )(x_flat)
        return out_flat.reshape(B, C, TARGET, TARGET)

    # General path: bilinear resize as MXU matmuls + fused normalize.
    # Conservative per-plane VMEM working set (blocks + every intermediate).
    per_plane = (2 * H * W * in_itemsize        # double-buffered input block
                 + 2 * TARGET * TARGET * 4      # double-buffered output block
                 + H * W * 4                    # f32 cast of the input planes
                 + H * TARGET * 4               # tmp after column resize
                 + TARGET * H * 4               # broadcast Ry for batched dot
                 + TARGET * TARGET * 4)         # dot_general result before store
    fixed = 2 * (TARGET * H + W * TARGET) * 4   # resident Ry / Rx^T
    P = _largest_divisor_fitting(n_planes, per_plane, fixed)
    grid = (n_planes // P,)

    # Fold the normalize scale ((1/255)/std) into the row-resize matrix: it
    # rides through the (linear) resize for free on the MXU.
    ry = jnp.asarray(_bilinear_matrix(TARGET, H) * _SCALE)    # (224, H)
    rxt = jnp.asarray(_bilinear_matrix(TARGET, W).T)          # (W, 224)

    flops = 2 * n_planes * (H * W * TARGET + H * TARGET * TARGET)
    bytes_accessed = (x_flat.size * in_itemsize
                      + n_planes * TARGET * TARGET * 4
                      + ry.size * 4 + rxt.size * 4)

    out_flat = pl.pallas_call(
        _resize_normalize_kernel,
        out_shape=jax.ShapeDtypeStruct((n_planes, TARGET, TARGET), jnp.float32),
        grid_spec=pltpu.PrefetchScalarGridSpec(
            num_scalar_prefetch=0,
            grid=grid,
            in_specs=[
                pl.BlockSpec((TARGET, H), lambda i: (0, 0)),   # Ry (resident)
                pl.BlockSpec((W, TARGET), lambda i: (0, 0)),   # Rx^T (resident)
                pl.BlockSpec((P, H, W), lambda i: (i, 0, 0)),  # P planes / step
            ],
            out_specs=pl.BlockSpec((P, TARGET, TARGET), lambda i: (i, 0, 0)),
        ),
        compiler_params=pltpu.CompilerParams(
            dimension_semantics=("parallel",),
            vmem_limit_bytes=_VMEM_LIMIT_BYTES),
        cost_estimate=pl.CostEstimate(
            flops=flops, transcendentals=0, bytes_accessed=bytes_accessed),
    )(ry, rxt, x_flat)

    return out_flat.reshape(B, C, TARGET, TARGET)


def _reference(x: jax.Array) -> jax.Array:
    """Pure-JAX reference (same bilinear + normalize) for sanity checking."""
    B, C, H, W = x.shape
    ry = jnp.asarray(_bilinear_matrix(TARGET, H))
    rx = jnp.asarray(_bilinear_matrix(TARGET, W))
    resized = jnp.einsum("oh,bchw,pw->bcop", ry, x.astype(jnp.float32), rx,
                         precision=lax.Precision.HIGHEST)
    return (resized * RESCALE - IMAGE_MEAN) / IMAGE_STD


if __name__ == "__main__":
    key = jax.random.PRNGKey(0)
    k0, k1 = jax.random.split(key)

    # 1) Resize path: small synthetic images, pixel values in [0, 255].
    B, C, H, W = 2, 3, 16, 16
    x = jax.random.uniform(k0, (B, C, H, W), dtype=jnp.float32) * 255.0
    pixel_values = jax.block_until_ready(model_pretext_transformers_forward(x))
    ref = _reference(x)
    assert pixel_values.shape == (B, C, TARGET, TARGET)
    assert pixel_values.dtype == jnp.float32
    np.testing.assert_allclose(np.asarray(pixel_values), np.asarray(ref),
                               rtol=1e-5, atol=1e-5)

    # 2) Already-224 fast path (pure normalize, no MXU).
    x2 = jax.random.uniform(k1, (1, 3, TARGET, TARGET), dtype=jnp.float32) * 255.0
    pixel_values2 = jax.block_until_ready(model_pretext_transformers_forward(x2))
    ref2 = _reference(x2)
    assert pixel_values2.shape == (1, 3, TARGET, TARGET)
    np.testing.assert_allclose(np.asarray(pixel_values2), np.asarray(ref2),
                               rtol=1e-5, atol=1e-5)

    print("KERNEL_OK")
</pallas_src>

<mosaic_0001>
module attributes {stable_mosaic.version = 11 : i64} {
  func.func @_resize_normalize_kernel(%arg0: i32, %arg1: memref<224x16xf32, #tpu.memory_space<vmem>>, %arg2: memref<16x224xf32, #tpu.memory_space<vmem>>, %arg3: memref<6x16x16xf32, #tpu.memory_space<vmem>>, %arg4: memref<6x224x224xf32, #tpu.memory_space<vmem>>) attributes {dimension_semantics = [#tpu.dimension_semantics<parallel>], iteration_bounds = array<i64: 1>, scalar_prefetch = 0 : i64, scratch_operands = 0 : i64, tpu.core_type = #tpu.core_type<tc>, window_params = [{pipeline_mode = #tpu.pipeline_mode<synchronous>, transform_indices = @transform_0, window_bounds = array<i64: 224, 16>}, {pipeline_mode = #tpu.pipeline_mode<synchronous>, transform_indices = @transform_1, window_bounds = array<i64: 16, 224>}, {transform_indices = @transform_2, window_bounds = array<i64: 6, 16, 16>}, {transform_indices = @transform_3, window_bounds = array<i64: 6, 224, 224>}]} {
    %c0 = arith.constant 0 : index
    %c0_0 = arith.constant 0 : index
    %c0_1 = arith.constant 0 : index
    %0 = vector.load %arg3[%c0, %c0_0, %c0_1] : memref<6x16x16xf32, #tpu.memory_space<vmem>>, vector<6x16x16xf32>
    %1 = vector.shape_cast %0 : vector<6x16x16xf32> to vector<96x16xf32>
    %c0_2 = arith.constant 0 : index
    %c0_3 = arith.constant 0 : index
    %2 = vector.load %arg2[%c0_2, %c0_3] : memref<16x224xf32, #tpu.memory_space<vmem>>, vector<16x224xf32>
    %cst = arith.constant dense<0.000000e+00> : vector<96x224xf32>
    %3 = tpu.matmul %1, %2, %cst {dimension_numbers = #tpu.dot_dimension_numbers<[1], [0], [0], [1], [0, 0, 1, 1], [], []>} : vector<96x16xf32>, vector<16x224xf32>, vector<96x224xf32> -> vector<96x224xf32>
    %4 = vector.shape_cast %3 : vector<96x224xf32> to vector<6x16x224xf32>
    %c0_4 = arith.constant 0 : index
    %c0_5 = arith.constant 0 : index
    %5 = vector.load %arg1[%c0_4, %c0_5] : memref<224x16xf32, #tpu.memory_space<vmem>>, vector<224x16xf32>
    %6 = vector.shape_cast %5 : vector<224x16xf32> to vector<1x224x16xf32>
    %7 = vector.broadcast %6 : vector<1x224x16xf32> to vector<6x224x16xf32>
    %cst_6 = arith.constant dense<0.000000e+00> : vector<6x224x224xf32>
    %8 = tpu.matmul %7, %4, %cst_6 {dimension_numbers = #tpu.dot_dimension_numbers<[2], [1], [1], [2], [0, 0, 0, 1, 1, 2], [0], [0]>} : vector<6x224x16xf32>, vector<6x16x224xf32>, vector<6x224x224xf32> -> vector<6x224x224xf32>
    %cst_7 = arith.constant 1.000000e+00 : f32
    %9 = vector.broadcast %cst_7 : f32 to vector<6x224x224xf32>
    %10 = arith.subf %8, %9 : vector<6x224x224xf32>
    %c0_8 = arith.constant 0 : index
    %c0_9 = arith.constant 0 : index
    %c0_10 = arith.constant 0 : index
    %11 = vector.load %arg4[%c0_8, %c0_9, %c0_10] : memref<6x224x224xf32, #tpu.memory_space<vmem>>, vector<6x224x224xf32>
    tpu.vector_store %arg4[%c0_8, %c0_9, %c0_10], %10 {strides = array<i32>} : memref<6x224x224xf32, #tpu.memory_space<vmem>>, vector<6x224x224xf32>,
    return
  }
  func.func @transform_0(%arg0: i32) -> (i32, i32) {
    %c0_i32 = arith.constant 0 : i32
    %c0_i32_0 = arith.constant 0 : i32
    %c0_i32_1 = arith.constant 0 : i32
    return %c0_i32, %c0_i32_0 : i32, i32
  }
  func.func @transform_1(%arg0: i32) -> (i32, i32) {
    %c0_i32 = arith.constant 0 : i32
    %c0_i32_0 = arith.constant 0 : i32
    %c0_i32_1 = arith.constant 0 : i32
    return %c0_i32, %c0_i32_0 : i32, i32
  }
  func.func @transform_2(%arg0: i32) -> (i32, i32, i32) {
    %c0_i32 = arith.constant 0 : i32
    %c0_i32_0 = arith.constant 0 : i32
    %c0_i32_1 = arith.constant 0 : i32
    return %arg0, %c0_i32, %c0_i32_0 : i32, i32, i32
  }
  func.func @transform_3(%arg0: i32) -> (i32, i32, i32) {
    %c0_i32 = arith.constant 0 : i32
    %c0_i32_0 = arith.constant 0 : i32
    %c0_i32_1 = arith.constant 0 : i32
    return %arg0, %c0_i32, %c0_i32_0 : i32, i32, i32
  }
}

</mosaic_0001>

<llo_original>
// kernel: tpu_custom_call.1
$region0: #{tpu_custom_call.1}
  #allocation0 [shape = 'u32[]', space=smem, size = 0x4, offset = 0x4, fixed_abs, tag = 'smem constant byte address 0x4 - core index']
  #allocation1 [shape = 'u32[144,128]{1,0:T(1,128)}', space=vmem, size = 0x12000, scoped, tag = 'internal scratch']
  %s0 = inlined_call_operand.vmem [shape: f32[224,16], index: 0, kind: input, shape index: {}]
  %s1 = inlined_call_operand.hbm [shape: f32[16,224], index: 1, kind: input, shape index: {}]
  %s2 = inlined_call_operand.hbm [shape: f32[6,16,16], index: 2, kind: input, shape index: {}]
  %s3 = inlined_call_operand.hbm [shape: f32[6,224,224], index: 3, kind: output, shape index: {}]
  %s4 = sld [smem:[#allocation0]]
  $region30: #{tpu_custom_call.1} parent=0
    _
  %s6 = ssub.s32 1, %s4
  %s7 = scalar_select 0, %s6, %s4
  $region1: #{tpu_custom_call.1} parent=0
    #allocation2 [shape = 'u8[16384]{0}', space=vmem, size = 0x4000, scoped, tag = 'input window, operand 1, single buffered']
    #allocation3 [shape = 's32[1]{0}', space=sflag, size = 0x4, scoped, tag = 'scoped memory for tpu_custom_call.1']
    #allocation4 [shape = 's32[1]{0}', space=sflag, size = 0x4, scoped, tag = 'scoped memory for tpu_custom_call.1']
    #allocation5 [shape = 'u8[49152]{0}', space=vmem, size = 0xc000, scoped, tag = 'input window, operand 2, single buffered']
    #allocation6 [shape = 's32[1]{0}', space=sflag, size = 0x4, scoped, tag = 'scoped memory for tpu_custom_call.1']
    #allocation7 [shape = 'u8[1376256]{0}', space=vmem, size = 0x150000, scoped, tag = 'output window, operand 0, single buffered']
    %8 = vsyncpa [#allocation3], 0
    %9 = vsyncpa [#allocation6], 0
    %10 = vsyncpa [#allocation4], 0
    // Predicated region
    $region2: #{tpu_custom_call.1} parent=1 // pred_check
      _
    $region3: #{tpu_custom_call.1} parent=1 // pred_check_branch
      %12 = sbr.rel (0) target = $region5
    $region4: #{tpu_custom_call.1} parent=1 // pred_region
      _
    $region5: #{tpu_custom_call.1} parent=1 // pred_fallthru
      _
    // Predicated region
    $region6: #{tpu_custom_call.1} parent=1 // pred_check
      _
    $region7: #{tpu_custom_call.1} parent=1 // pred_check_branch
      %14 = sbr.rel (0) target = $region9
    $region8: #{tpu_custom_call.1} parent=1 // pred_region
      %s16 = ssub.s32 512, 512
      %17 = vsyncadd [#allocation3], %s16
      %s18 = sshll.u32 [#allocation2], 4
      %s19 = int_to_ptr.vmem [resolvable:$true] %s18
      %24 = dma.hbm_to_vmem [thread:$0]  %s1, 512, %s19, [#allocation3], 256, 256, 16
    $region9: #{tpu_custom_call.1} parent=1 // pred_fallthru
      _
    // Predicated region
    $region10: #{tpu_custom_call.1} parent=1 // pred_check
      _
    $region11: #{tpu_custom_call.1} parent=1 // pred_check_branch
      %26 = sbr.rel (0) target = $region13
    $region12: #{tpu_custom_call.1} parent=1 // pred_region
      %s28 = ssub.s32 1536, 1536
      %29 = vsyncadd [#allocation6], %s28
      %s30 = sshll.u32 [#allocation5], 4
      %s31 = int_to_ptr.vmem [resolvable:$true] %s30
      %36 = dma.hbm_to_vmem [thread:$0]  %s2, 1536, %s31, [#allocation6], 128, 128, 8
    $region13: #{tpu_custom_call.1} parent=1 // pred_fallthru
      _
    // Predicated region
    $region14: #{tpu_custom_call.1} parent=1 // pred_check
      _
    $region15: #{tpu_custom_call.1} parent=1 // pred_check_branch
      %38 = sbr.rel (0) target = $region17
    $region16: #{tpu_custom_call.1} parent=1 // pred_region
      %39 = dma.done [#allocation3], 512
    $region17: #{tpu_custom_call.1} parent=1 // pred_fallthru
      _
    // Predicated region
    $region18: #{tpu_custom_call.1} parent=1 // pred_check
      _
    $region19: #{tpu_custom_call.1} parent=1 // pred_check_branch
      %41 = sbr.rel (0) target = $region21
    $region20: #{tpu_custom_call.1} parent=1 // pred_region
      %42 = dma.done [#allocation6], 1536
    $region21: #{tpu_custom_call.1} parent=1 // pred_fallthru
      _
    %v43 = vld [vmem:[#allocation5] sm:$0xff]
    %v44 = vld [vmem:[#allocation5 + $0x8] sm:$0xff]
    %v45 = vld [vmem:[#allocation5 + $0x10] sm:$0xff]
    %v46 = vld [vmem:[#allocation5 + $0x18] sm:$0xff]
    %v47 = vld [vmem:[#allocation5 + $0x20] sm:$0xff]
    %v48 = vld [vmem:[#allocation5 + $0x28] sm:$0xff]
    %v49 = vld [vmem:[#allocation5 + $0x30] sm:$0xff]
    %v50 = vld [vmem:[#allocation5 + $0x38] sm:$0xff]
    %v51 = vld [vmem:[#allocation5 + $0x40] sm:$0xff]
    %v52 = vld [vmem:[#allocation5 + $0x48] sm:$0xff]
    %v53 = vld [vmem:[#allocation5 + $0x50] sm:$0xff]
    %v54 = vld [vmem:[#allocation5 + $0x58] sm:$0xff]
    %v55 = vld [vmem:[#allocation2] sm:$0xff]
    %v56 = vld [vmem:[#allocation2 + $0x8] sm:$0xff]
    %v57 = vld [vmem:[#allocation2 + $0x10] sm:$0xff]
    %v58 = vld [vmem:[#allocation2 + $0x18] sm:$0xff]
    %vm59 = vcmask 130048
    %v61 = vsel %vm59, %v43, 0
    %v64 = vsel %vm59, %v44, 0
    %v67 = vsel %vm59, %v45, 0
    %v70 = vsel %vm59, %v46, 0
    %v73 = vsel %vm59, %v47, 0
    %v76 = vsel %vm59, %v48, 0
    %v79 = vsel %vm59, %v49, 0
    %v82 = vsel %vm59, %v50, 0
    %v85 = vsel %vm59, %v51, 0
    %v88 = vsel %vm59, %v52, 0
    %v91 = vsel %vm59, %v53, 0
    %v94 = vsel %vm59, %v54, 0
    %96 = vmatprep.subr.mxu0 %v56
    %97 = vmatpush1.msra.mxu0 %v55
    %98 = vmatprep.subr.mxu0 %v58
    %99 = vmatpush1.msra.mxu0 %v57
    %100 = vmatprep.subr.mxu0 0.0
    %101 = vmatpush1.msra.mxu0 0.0
    %102 = vmatprep.subr.mxu0 0.0
    %103 = vmatpush1.msra.mxu0 0.0
    %104 = vmatprep.subr.mxu0 0.0
    %105 = vmatpush1.msra.mxu0 0.0
    %106 = vmatprep.subr.mxu0 0.0
    %107 = vmatpush1.msra.mxu0 0.0
    %108 = vmatprep.subr.mxu0 0.0
    %109 = vmatpush1.msra.mxu0 0.0
    %110 = vmatprep.subr.mxu0 0.0
    %111 = vmatpush1.msra.mxu0 0.0
    %112 = vmatprep.subr.mxu0 0.0
    %113 = vmatpush1.msra.mxu0 0.0
    %114 = vmatprep.subr.mxu0 0.0
    %115 = vmatpush1.msra.mxu0 0.0
    %116 = vmatprep.subr.mxu0 0.0
    %117 = vmatpush1.msra.mxu0 0.0
    %118 = vmatprep.subr.mxu0 0.0
    %119 = vmatpush1.msra.mxu0 0.0
    %120 = vmatprep.subr.mxu0 0.0
    %121 = vmatpush1.msra.mxu0 0.0
    %122 = vmatprep.subr.mxu0 0.0
    %123 = vmatpush1.msra.mxu0 0.0
    %124 = vmatprep.subr.mxu0 0.0
    %125 = vmatpush1.msra.mxu0 0.0
    %126 = vmatprep.subr.mxu0 0.0
    %127 = vmatpush1.msra.mxu0 0.0
    %128 = vmatprep.subr.mxu0 0.0
    %129 = vmatpush1.msra.mxu0 0.0
    %130 = vmatprep.subr.mxu0 0.0
    %131 = vmatpush1.msra.mxu0 0.0
    %132 = vmatprep.subr.mxu0 0.0
    %133 = vmatpush1.msra.mxu0 0.0
    %134 = vmatprep.subr.mxu0 0.0
    %135 = vmatpush1.msra.mxu0 0.0
    %136 = vmatprep.subr.mxu0 0.0
    %137 = vmatpush1.msra.mxu0 0.0
    %138 = vmatprep.subr.mxu0 0.0
    %139 = vmatpush1.msra.mxu0 0.0
    %140 = vmatprep.subr.mxu0 0.0
    %141 = vmatpush1.msra.mxu0 0.0
    %142 = vmatprep.subr.mxu0 0.0
    %143 = vmatpush1.msra.mxu0 0.0
    %144 = vmatprep.subr.mxu0 0.0
    %145 = vmatpush1.msra.mxu0 0.0
    %146 = vmatprep.subr.mxu0 0.0
    %147 = vmatpush1.msra.mxu0 0.0
    %148 = vmatprep.subr.mxu0 0.0
    %149 = vmatpush1.msra.mxu0 0.0
    %150 = vmatprep.subr.mxu0 0.0
    %151 = vmatpush1.msra.mxu0 0.0
    %152 = vmatprep.subr.mxu0 0.0
    %153 = vmatpush1.msra.mxu0 0.0
    %154 = vmatprep.subr.mxu0 0.0
    %155 = vmatpush1.msra.mxu0 0.0
    %156 = vmatprep.subr.mxu0 0.0
    %157 = vmatpush1.msra.mxu0 0.0
    %158 = vmatprep.subr.mxu0 0.0
    %159 = vmatpush1.msra.mxu0 0.0
    %160 = vmatprep.mubr.f32.mxu0 0.0
    %161 = vmatmul.mubr.f32.gmra.mrb[0].mxu0 %v61
    %v162 = vpop.f32.mrb[0].mxu0
    %v163 = vadd.f32 0.0, %v162
    %v164 = vpop.f32.mrb[0].mxu0
    %v165 = vadd.f32 0.0, %v164
    %166 = vmatprep.mubr.f32.mxu0 0.0
    %167 = vmatmul.mubr.f32.gmra.mrb[0].mxu0 %v64
    %v168 = vpop.f32.mrb[0].mxu0
    %v169 = vadd.f32 0.0, %v168
    %v170 = vpop.f32.mrb[0].mxu0
    %v171 = vadd.f32 0.0, %v170
    %172 = vmatprep.mubr.f32.mxu0 0.0
    %173 = vmatmul.mubr.f32.gmra.mrb[0].mxu0 %v67
    %v174 = vpop.f32.mrb[0].mxu0
    %v175 = vadd.f32 0.0, %v174
    %v176 = vpop.f32.mrb[0].mxu0
    %v177 = vadd.f32 0.0, %v176
    %178 = vmatprep.mubr.f32.mxu0 0.0
    %179 = vmatmul.mubr.f32.gmra.mrb[0].mxu0 %v70
    %v180 = vpop.f32.mrb[0].mxu0
    %v181 = vadd.f32 0.0, %v180
    %v182 = vpop.f32.mrb[0].mxu0
    %v183 = vadd.f32 0.0, %v182
    %184 = vmatprep.mubr.f32.mxu0 0.0
    %185 = vmatmul.mubr.f32.gmra.mrb[0].mxu0 %v73
    %v186 = vpop.f32.mrb[0].mxu0
    %v187 = vadd.f32 0.0, %v186
    %v188 = vpop.f32.mrb[0].mxu0
    %v189 = vadd.f32 0.0, %v188
    %190 = vmatprep.mubr.f32.mxu0 0.0
    %191 = vmatmul.mubr.f32.gmra.mrb[0].mxu0 %v76
    %v192 = vpop.f32.mrb[0].mxu0
    %v193 = vadd.f32 0.0, %v192
    %v194 = vpop.f32.mrb[0].mxu0
    %v195 = vadd.f32 0.0, %v194
    %196 = vmatprep.mubr.f32.mxu0 0.0
    %197 = vmatmul.mubr.f32.gmra.mrb[0].mxu0 %v79
    %v198 = vpop.f32.mrb[0].mxu0
    %v199 = vadd.f32 0.0, %v198
    %v200 = vpop.f32.mrb[0].mxu0
    %v201 = vadd.f32 0.0, %v200
    %202 = vmatprep.mubr.f32.mxu0 0.0
    %203 = vmatmul.mubr.f32.gmra.mrb[0].mxu0 %v82
    %v204 = vpop.f32.mrb[0].mxu0
    %v205 = vadd.f32 0.0, %v204
    %v206 = vpop.f32.mrb[0].mxu0
    %v207 = vadd.f32 0.0, %v206
    %208 = vmatprep.mubr.f32.mxu0 0.0
    %209 = vmatmul.mubr.f32.gmra.mrb[0].mxu0 %v85
    %v210 = vpop.f32.mrb[0].mxu0
    %v211 = vadd.f32 0.0, %v210
    %v212 = vpop.f32.mrb[0].mxu0
    %v213 = vadd.f32 0.0, %v212
    %214 = vmatprep.mubr.f32.mxu0 0.0
    %215 = vmatmul.mubr.f32.gmra.mrb[0].mxu0 %v88
    %v216 = vpop.f32.mrb[0].mxu0
    %v217 = vadd.f32 0.0, %v216
    %v218 = vpop.f32.mrb[0].mxu0
    %v219 = vadd.f32 0.0, %v218
    %220 = vmatprep.mubr.f32.mxu0 0.0
    %221 = vmatmul.mubr.f32.gmra.mrb[0].mxu0 %v91
    %v222 = vpop.f32.mrb[0].mxu0
    %v223 = vadd.f32 0.0, %v222
    %v224 = vpop.f32.mrb[0].mxu0
    %v225 = vadd.f32 0.0, %v224
    %226 = vmatprep.mubr.f32.mxu0 0.0
    %227 = vmatmul.mubr.f32.gmra.mrb[0].mxu0 %v94
    %v228 = vpop.f32.mrb[0].mxu0
    %v229 = vadd.f32 0.0, %v228
    %v230 = vpop.f32.mrb[0].mxu0
    %v231 = vadd.f32 0.0, %v230
    %232 = vdwg.mxu0
    %v233 = vld [vmem:[%s0] sm:$0xff]
    %v234 = vld [vmem:[%s0 + $0x8] sm:$0xff]
    %v235 = vld [vmem:[%s0 + $0x10] sm:$0xff]
    %v236 = vld [vmem:[%s0 + $0x18] sm:$0xff]
    %v237 = vld [vmem:[%s0 + $0x20] sm:$0xff]
    %v238 = vld [vmem:[%s0 + $0x28] sm:$0xff]
    %v239 = vld [vmem:[%s0 + $0x30] sm:$0xff]
    %v240 = vld [vmem:[%s0 + $0x38] sm:$0xff]
    %v241 = vld [vmem:[%s0 + $0x40] sm:$0xff]
    %v242 = vld [vmem:[%s0 + $0x48] sm:$0xff]
    %v243 = vld [vmem:[%s0 + $0x50] sm:$0xff]
    %v244 = vld [vmem:[%s0 + $0x58] sm:$0xff]
    %v245 = vld [vmem:[%s0 + $0x60] sm:$0xff]
    %v246 = vld [vmem:[%s0 + $0x68] sm:$0xff]
    %v247 = vld [vmem:[%s0 + $0x70] sm:$0xff]
    %v248 = vld [vmem:[%s0 + $0x78] sm:$0xff]
    %v249 = vld [vmem:[%s0 + $0x80] sm:$0xff]
    %v250 = vld [vmem:[%s0 + $0x88] sm:$0xff]
    %v251 = vld [vmem:[%s0 + $0x90] sm:$0xff]
    %v252 = vld [vmem:[%s0 + $0x98] sm:$0xff]
    %v253 = vld [vmem:[%s0 + $0xa0] sm:$0xff]
    %v254 = vld [vmem:[%s0 + $0xa8] sm:$0xff]
    %v255 = vld [vmem:[%s0 + $0xb0] sm:$0xff]
    %v256 = vld [vmem:[%s0 + $0xb8] sm:$0xff]
    %v257 = vld [vmem:[%s0 + $0xc0] sm:$0xff]
    %v258 = vld [vmem:[%s0 + $0xc8] sm:$0xff]
    %v259 = vld [vmem:[%s0 + $0xd0] sm:$0xff]
    %v260 = vld [vmem:[%s0 + $0xd8] sm:$0xff]
    %v262 = vsel %vm59, %v233, 0
    %v265 = vsel %vm59, %v234, 0
    %v268 = vsel %vm59, %v235, 0
    %v271 = vsel %vm59, %v236, 0
    %v274 = vsel %vm59, %v237, 0
    %v277 = vsel %vm59, %v238, 0
    %v280 = vsel %vm59, %v239, 0
    %v283 = vsel %vm59, %v240, 0
    %v286 = vsel %vm59, %v241, 0
    %v289 = vsel %vm59, %v242, 0
    %v292 = vsel %vm59, %v243, 0
    %v295 = vsel %vm59, %v244, 0
    %v298 = vsel %vm59, %v245, 0
    %v301 = vsel %vm59, %v246, 0
    %v304 = vsel %vm59, %v247, 0
    %v307 = vsel %vm59, %v248, 0
    %v310 = vsel %vm59, %v249, 0
    %v313 = vsel %vm59, %v250, 0
    %v316 = vsel %vm59, %v251, 0
    %v319 = vsel %vm59, %v252, 0
    %v322 = vsel %vm59, %v253, 0
    %v325 = vsel %vm59, %v254, 0
    %v328 = vsel %vm59, %v255, 0
    %v331 = vsel %vm59, %v256, 0
    %v334 = vsel %vm59, %v257, 0
    %v337 = vsel %vm59, %v258, 0
    %v340 = vsel %vm59, %v259, 0
    %v343 = vsel %vm59, %v260, 0
    %345 = vmatprep.subr.mxu0 %v165
    %346 = vmatpush1.msra.mxu0 %v163
    %347 = vmatprep.subr.mxu0 %v171
    %348 = vmatpush1.msra.mxu0 %v169
    %349 = vmatprep.subr.mxu0 0.0
    %350 = vmatpush1.msra.mxu0 0.0
    %351 = vmatprep.subr.mxu0 0.0
    %352 = vmatpush1.msra.mxu0 0.0
    %353 = vmatprep.subr.mxu0 0.0
    %354 = vmatpush1.msra.mxu0 0.0
    %355 = vmatprep.subr.mxu0 0.0
    %356 = vmatpush1.msra.mxu0 0.0
    %357 = vmatprep.subr.mxu0 0.0
    %358 = vmatpush1.msra.mxu0 0.0
    %359 = vmatprep.subr.mxu0 0.0
    %360 = vmatpush1.msra.mxu0 0.0
    %361 = vmatprep.subr.mxu0 0.0
    %362 = vmatpush1.msra.mxu0 0.0
    %363 = vmatprep.subr.mxu0 0.0
    %364 = vmatpush1.msra.mxu0 0.0
    %365 = vmatprep.subr.mxu0 0.0
    %366 = vmatpush1.msra.mxu0 0.0
    %367 = vmatprep.subr.mxu0 0.0
    %368 = vmatpush1.msra.mxu0 0.0
    %369 = vmatprep.subr.mxu0 0.0
    %370 = vmatpush1.msra.mxu0 0.0
    %371 = vmatprep.subr.mxu0 0.0
    %372 = vmatpush1.msra.mxu0 0.0
    %373 = vmatprep.subr.mxu0 0.0
    %374 = vmatpush1.msra.mxu0 0.0
    %375 = vmatprep.subr.mxu0 0.0
    %376 = vmatpush1.msra.mxu0 0.0
    %377 = vmatprep.subr.mxu0 0.0
    %378 = vmatpush1.msra.mxu0 0.0
    %379 = vmatprep.subr.mxu0 0.0
    %380 = vmatpush1.msra.mxu0 0.0
    %381 = vmatprep.subr.mxu0 0.0
    %382 = vmatpush1.msra.mxu0 0.0
    %383 = vmatprep.subr.mxu0 0.0
    %384 = vmatpush1.msra.mxu0 0.0
    %385 = vmatprep.subr.mxu0 0.0
    %386 = vmatpush1.msra.mxu0 0.0
    %387 = vmatprep.subr.mxu0 0.0
    %388 = vmatpush1.msra.mxu0 0.0
    %389 = vmatprep.subr.mxu0 0.0
    %390 = vmatpush1.msra.mxu0 0.0
    %391 = vmatprep.subr.mxu0 0.0
    %392 = vmatpush1.msra.mxu0 0.0
    %393 = vmatprep.subr.mxu0 0.0
    %394 = vmatpush1.msra.mxu0 0.0
    %395 = vmatprep.subr.mxu0 0.0
    %396 = vmatpush1.msra.mxu0 0.0
    %397 = vmatprep.subr.mxu0 0.0
    %398 = vmatpush1.msra.mxu0 0.0
    %399 = vmatprep.subr.mxu0 0.0
    %400 = vmatpush1.msra.mxu0 0.0
    %401 = vmatprep.subr.mxu0 0.0
    %402 = vmatpush1.msra.mxu0 0.0
    %403 = vmatprep.subr.mxu0 0.0
    %404 = vmatpush1.msra.mxu0 0.0
    %405 = vmatprep.subr.mxu0 0.0
    %406 = vmatpush1.msra.mxu0 0.0
    %407 = vmatprep.subr.mxu0 0.0
    %408 = vmatpush1.msra.mxu0 0.0
    %409 = vmatprep.mubr.f32.mxu0 0.0
    %410 = vmatmul.mubr.f32.gmra.mrb[0].mxu0 %v262
    %v411 = vpop.f32.mrb[0].mxu0
    %v412 = vadd.f32 0.0, %v411
    %v413 = vpop.f32.mrb[0].mxu0
    %v414 = vadd.f32 0.0, %v413
    %415 = vmatprep.mubr.f32.mxu0 0.0
    %416 = vmatmul.mubr.f32.gmra.mrb[0].mxu0 %v265
    %v417 = vpop.f32.mrb[0].mxu0
    %v418 = vadd.f32 0.0, %v417
    %v419 = vpop.f32.mrb[0].mxu0
    %v420 = vadd.f32 0.0, %v419
    %421 = vmatprep.mubr.f32.mxu0 0.0
    %422 = vmatmul.mubr.f32.gmra.mrb[0].mxu0 %v268
    %v423 = vpop.f32.mrb[0].mxu0
    %v424 = vadd.f32 0.0, %v423
    %v425 = vpop.f32.mrb[0].mxu0
    %v426 = vadd.f32 0.0, %v425
    %427 = vmatprep.mubr.f32.mxu0 0.0
    %428 = vmatmul.mubr.f32.gmra.mrb[0].mxu0 %v271
    %v429 = vpop.f32.mrb[0].mxu0
    %v430 = vadd.f32 0.0, %v429
    %v431 = vpop.f32.mrb[0].mxu0
    %v432 = vadd.f32 0.0, %v431
    %433 = vmatprep.mubr.f32.mxu0 0.0
    %434 = vmatmul.mubr.f32.gmra.mrb[0].mxu0 %v274
    %v435 = vpop.f32.mrb[0].mxu0
    %v436 = vadd.f32 0.0, %v435
    %v437 = vpop.f32.mrb[0].mxu0
    %v438 = vadd.f32 0.0, %v437
    %439 = vmatprep.mubr.f32.mxu0 0.0
    %440 = vmatmul.mubr.f32.gmra.mrb[0].mxu0 %v277
    %v441 = vpop.f32.mrb[0].mxu0
    %v442 = vadd.f32 0.0, %v441
    %v443 = vpop.f32.mrb[0].mxu0
    %v444 = vadd.f32 0.0, %v443
    %445 = vmatprep.mubr.f32.mxu0 0.0
    %446 = vmatmul.mubr.f32.gmra.mrb[0].mxu0 %v280
    %v447 = vpop.f32.mrb[0].mxu0
    %v448 = vadd.f32 0.0, %v447
    %v449 = vpop.f32.mrb[0].mxu0
    %v450 = vadd.f32 0.0, %v449
    %451 = vmatprep.mubr.f32.mxu0 0.0
    %452 = vmatmul.mubr.f32.gmra.mrb[0].mxu0 %v283
    %v453 = vpop.f32.mrb[0].mxu0
    %v454 = vadd.f32 0.0, %v453
    %v455 = vpop.f32.mrb[0].mxu0
    %v456 = vadd.f32 0.0, %v455
    %457 = vmatprep.mubr.f32.mxu0 0.0
    %458 = vmatmul.mubr.f32.gmra.mrb[0].mxu0 %v286
    %v459 = vpop.f32.mrb[0].mxu0
    %v460 = vadd.f32 0.0, %v459
    %v461 = vpop.f32.mrb[0].mxu0
    %v462 = vadd.f32 0.0, %v461
    %463 = vmatprep.mubr.f32.mxu0 0.0
    %464 = vmatmul.mubr.f32.gmra.mrb[0].mxu0 %v289
    %v465 = vpop.f32.mrb[0].mxu0
    %v466 = vadd.f32 0.0, %v465
    %v467 = vpop.f32.mrb[0].mxu0
    %v468 = vadd.f32 0.0, %v467
    %469 = vmatprep.mubr.f32.mxu0 0.0
    %470 = vmatmul.mubr.f32.gmra.mrb[0].mxu0 %v292
    %v471 = vpop.f32.mrb[0].mxu0
    %v472 = vadd.f32 0.0, %v471
    %v473 = vpop.f32.mrb[0].mxu0
    %v474 = vadd.f32 0.0, %v473
    %475 = vmatprep.mubr.f32.mxu0 0.0
    %476 = vmatmul.mubr.f32.gmra.mrb[0].mxu0 %v295
    %v477 = vpop.f32.mrb[0].mxu0
    %v478 = vadd.f32 0.0, %v477
    %v479 = vpop.f32.mrb[0].mxu0
    %v480 = vadd.f32 0.0, %v479
    %481 = vmatprep.mubr.f32.mxu0 0.0
    %482 = vmatmul.mubr.f32.gmra.mrb[0].mxu0 %v298
    %v483 = vpop.f32.mrb[0].mxu0
    %v484 = vadd.f32 0.0, %v483
    %v485 = vpop.f32.mrb[0].mxu0
    %v486 = vadd.f32 0.0, %v485
    %487 = vmatprep.mubr.f32.mxu0 0.0
    %488 = vmatmul.mubr.f32.gmra.mrb[0].mxu0 %v301
    %v489 = vpop.f32.mrb[0].mxu0
    %v490 = vadd.f32 0.0, %v489
    %v491 = vpop.f32.mrb[0].mxu0
    %v492 = vadd.f32 0.0, %v491
    %493 = vmatprep.mubr.f32.mxu0 0.0
    %494 = vmatmul.mubr.f32.gmra.mrb[0].mxu0 %v304
    %v495 = vpop.f32.mrb[0].mxu0
    %v496 = vadd.f32 0.0, %v495
    %v497 = vpop.f32.mrb[0].mxu0
    %v498 = vadd.f32 0.0, %v497
    %499 = vmatprep.mubr.f32.mxu0 0.0
    %500 = vmatmul.mubr.f32.gmra.mrb[0].mxu0 %v307
    %v501 = vpop.f32.mrb[0].mxu0
    %v502 = vadd.f32 0.0, %v501
    %v503 = vpop.f32.mrb[0].mxu0
    %v504 = vadd.f32 0.0, %v503
    %505 = vmatprep.mubr.f32.mxu0 0.0
    %506 = vmatmul.mubr.f32.gmra.mrb[0].mxu0 %v310
    %v507 = vpop.f32.mrb[0].mxu0
    %v508 = vadd.f32 0.0, %v507
    %v509 = vpop.f32.mrb[0].mxu0
    %v510 = vadd.f32 0.0, %v509
    %511 = vmatprep.mubr.f32.mxu0 0.0
    %512 = vmatmul.mubr.f32.gmra.mrb[0].mxu0 %v313
    %v513 = vpop.f32.mrb[0].mxu0
    %v514 = vadd.f32 0.0, %v513
    %v515 = vpop.f32.mrb[0].mxu0
    %v516 = vadd.f32 0.0, %v515
    %517 = vmatprep.mubr.f32.mxu0 0.0
    %518 = vmatmul.mubr.f32.gmra.mrb[0].mxu0 %v316
    %v519 = vpop.f32.mrb[0].mxu0
    %v520 = vadd.f32 0.0, %v519
    %v521 = vpop.f32.mrb[0].mxu0
    %v522 = vadd.f32 0.0, %v521
    %523 = vmatprep.mubr.f32.mxu0 0.0
    %524 = vmatmul.mubr.f32.gmra.mrb[0].mxu0 %v319
    %v525 = vpop.f32.mrb[0].mxu0
    %v526 = vadd.f32 0.0, %v525
    %v527 = vpop.f32.mrb[0].mxu0
    %v528 = vadd.f32 0.0, %v527
    %529 = vmatprep.mubr.f32.mxu0 0.0
    %530 = vmatmul.mubr.f32.gmra.mrb[0].mxu0 %v322
    %v531 = vpop.f32.mrb[0].mxu0
    %v532 = vadd.f32 0.0, %v531
    %v533 = vpop.f32.mrb[0].mxu0
    %v534 = vadd.f32 0.0, %v533
    %535 = vmatprep.mubr.f32.mxu0 0.0
    %536 = vmatmul.mubr.f32.gmra.mrb[0].mxu0 %v325
    %v537 = vpop.f32.mrb[0].mxu0
    %v538 = vadd.f32 0.0, %v537
    %v539 = vpop.f32.mrb[0].mxu0
    %v540 = vadd.f32 0.0, %v539
    %541 = vmatprep.mubr.f32.mxu0 0.0
    %542 = vmatmul.mubr.f32.gmra.mrb[0].mxu0 %v328
    %v543 = vpop.f32.mrb[0].mxu0
    %v544 = vadd.f32 0.0, %v543
    %v545 = vpop.f32.mrb[0].mxu0
    %v546 = vadd.f32 0.0, %v545
    %547 = vmatprep.mubr.f32.mxu0 0.0
    %548 = vmatmul.mubr.f32.gmra.mrb[0].mxu0 %v331
    %v549 = vpop.f32.mrb[0].mxu0
    %v550 = vadd.f32 0.0, %v549
    %v551 = vpop.f32.mrb[0].mxu0
    %v552 = vadd.f32 0.0, %v551
    %553 = vmatprep.mubr.f32.mxu0 0.0
    %554 = vmatmul.mubr.f32.gmra.mrb[0].mxu0 %v334
    %v555 = vpop.f32.mrb[0].mxu0
    %v556 = vadd.f32 0.0, %v555
    %v557 = vpop.f32.mrb[0].mxu0
    %v558 = vadd.f32 0.0, %v557
    %559 = vmatprep.mubr.f32.mxu0 0.0
    %560 = vmatmul.mubr.f32.gmra.mrb[0].mxu0 %v337
    %v561 = vpop.f32.mrb[0].mxu0
    %v562 = vadd.f32 0.0, %v561
    %v563 = vpop.f32.mrb[0].mxu0
    %v564 = vadd.f32 0.0, %v563
    %565 = vmatprep.mubr.f32.mxu0 0.0
    %566 = vmatmul.mubr.f32.gmra.mrb[0].mxu0 %v340
    %v567 = vpop.f32.mrb[0].mxu0
    %v568 = vadd.f32 0.0, %v567
    %v569 = vpop.f32.mrb[0].mxu0
    %v570 = vadd.f32 0.0, %v569
    %571 = vmatprep.mubr.f32.mxu0 0.0
    %572 = vmatmul.mubr.f32.gmra.mrb[0].mxu0 %v343
    %v573 = vpop.f32.mrb[0].mxu0
    %v574 = vadd.f32 0.0, %v573
    %v575 = vpop.f32.mrb[0].mxu0
    %v576 = vadd.f32 0.0, %v575
    %577 = vdwg.mxu0
    %578 = vmatprep.subr.mxu0 %v177
    %579 = vmatpush1.msra.mxu0 %v175
    %580 = vmatprep.subr.mxu0 %v183
    %581 = vmatpush1.msra.mxu0 %v181
    %582 = vmatprep.subr.mxu0 0.0
    %583 = vmatpush1.msra.mxu0 0.0
    %584 = vmatprep.subr.mxu0 0.0
    %585 = vmatpush1.msra.mxu0 0.0
    %586 = vmatprep.subr.mxu0 0.0
    %587 = vmatpush1.msra.mxu0 0.0
    %588 = vmatprep.subr.mxu0 0.0
    %589 = vmatpush1.msra.mxu0 0.0
    %590 = vmatprep.subr.mxu0 0.0
    %591 = vmatpush1.msra.mxu0 0.0
    %592 = vmatprep.subr.mxu0 0.0
    %593 = vmatpush1.msra.mxu0 0.0
    %594 = vmatprep.subr.mxu0 0.0
    %595 = vmatpush1.msra.mxu0 0.0
    %596 = vmatprep.subr.mxu0 0.0
    %597 = vmatpush1.msra.mxu0 0.0
    %598 = vmatprep.subr.mxu0 0.0
    %599 = vmatpush1.msra.mxu0 0.0
    %600 = vmatprep.subr.mxu0 0.0
    %601 = vmatpush1.msra.mxu0 0.0
    %602 = vmatprep.subr.mxu0 0.0
    %603 = vmatpush1.msra.mxu0 0.0
    %604 = vmatprep.subr.mxu0 0.0
    %605 = vmatpush1.msra.mxu0 0.0
    %606 = vmatprep.subr.mxu0 0.0
    %607 = vmatpush1.msra.mxu0 0.0
    %608 = vmatprep.subr.mxu0 0.0
    %609 = vmatpush1.msra.mxu0 0.0
    %610 = vmatprep.subr.mxu0 0.0
    %611 = vmatpush1.msra.mxu0 0.0
    %612 = vmatprep.subr.mxu0 0.0
    %613 = vmatpush1.msra.mxu0 0.0
    %614 = vmatprep.subr.mxu0 0.0
    %615 = vmatpush1.msra.mxu0 0.0
    %616 = vmatprep.subr.mxu0 0.0
    %617 = vmatpush1.msra.mxu0 0.0
    %618 = vmatprep.subr.mxu0 0.0
    %619 = vmatpush1.msra.mxu0 0.0
    %620 = vmatprep.subr.mxu0 0.0
    %621 = vmatpush1.msra.mxu0 0.0
    %622 = vmatprep.subr.mxu0 0.0
    %623 = vmatpush1.msra.mxu0 0.0
    %624 = vmatprep.subr.mxu0 0.0
    %625 = vmatpush1.msra.mxu0 0.0
    %626 = vmatprep.subr.mxu0 0.0
    %627 = vmatpush1.msra.mxu0 0.0
    %628 = vmatprep.subr.mxu0 0.0
    %629 = vmatpush1.msra.mxu0 0.0
    %630 = vmatprep.subr.mxu0 0.0
    %631 = vmatpush1.msra.mxu0 0.0
    %632 = vmatprep.subr.mxu0 0.0
    %633 = vmatpush1.msra.mxu0 0.0
    %634 = vmatprep.subr.mxu0 0.0
    %635 = vmatpush1.msra.mxu0 0.0
    %636 = vmatprep.subr.mxu0 0.0
    %637 = vmatpush1.msra.mxu0 0.0
    %638 = vmatprep.subr.mxu0 0.0
    %639 = vmatpush1.msra.mxu0 0.0
    %640 = vmatprep.subr.mxu0 0.0
    %641 = vmatpush1.msra.mxu0 0.0
    %642 = vmatprep.mubr.f32.mxu0 0.0
    %643 = vmatmul.mubr.f32.gmra.mrb[0].mxu0 %v262
    %v644 = vpop.f32.mrb[0].mxu0
    %v645 = vadd.f32 0.0, %v644
    %v646 = vpop.f32.mrb[0].mxu0
    %v647 = vadd.f32 0.0, %v646
    %648 = vmatprep.mubr.f32.mxu0 0.0
    %649 = vmatmul.mubr.f32.gmra.mrb[0].mxu0 %v265
    %v650 = vpop.f32.mrb[0].mxu0
    %v651 = vadd.f32 0.0, %v650
    %v652 = vpop.f32.mrb[0].mxu0
    %v653 = vadd.f32 0.0, %v652
    %654 = vmatprep.mubr.f32.mxu0 0.0
    %655 = vmatmul.mubr.f32.gmra.mrb[0].mxu0 %v268
    %v656 = vpop.f32.mrb[0].mxu0
    %v657 = vadd.f32 0.0, %v656
    %v658 = vpop.f32.mrb[0].mxu0
    %v659 = vadd.f32 0.0, %v658
    %660 = vmatprep.mubr.f32.mxu0 0.0
    %661 = vmatmul.mubr.f32.gmra.mrb[0].mxu0 %v271
    %v662 = vpop.f32.mrb[0].mxu0
    %v663 = vadd.f32 0.0, %v662
    %v664 = vpop.f32.mrb[0].mxu0
    %v665 = vadd.f32 0.0, %v664
    %666 = vmatprep.mubr.f32.mxu0 0.0
    %667 = vmatmul.mubr.f32.gmra.mrb[0].mxu0 %v274
    %v668 = vpop.f32.mrb[0].mxu0
    %v669 = vadd.f32 0.0, %v668
    %v670 = vpop.f32.mrb[0].mxu0
    %v671 = vadd.f32 0.0, %v670
    %672 = vmatprep.mubr.f32.mxu0 0.0
    %673 = vmatmul.mubr.f32.gmra.mrb[0].mxu0 %v277
    %v674 = vpop.f32.mrb[0].mxu0
    %v675 = vadd.f32 0.0, %v674
    %v676 = vpop.f32.mrb[0].mxu0
    %v677 = vadd.f32 0.0, %v676
    %678 = vmatprep.mubr.f32.mxu0 0.0
    %679 = vmatmul.mubr.f32.gmra.mrb[0].mxu0 %v280
    %v680 = vpop.f32.mrb[0].mxu0
    %v681 = vadd.f32 0.0, %v680
    %v682 = vpop.f32.mrb[0].mxu0
    %v683 = vadd.f32 0.0, %v682
    %684 = vmatprep.mubr.f32.mxu0 0.0
    %685 = vmatmul.mubr.f32.gmra.mrb[0].mxu0 %v283
    %v686 = vpop.f32.mrb[0].mxu0
    %v687 = vadd.f32 0.0, %v686
    %v688 = vpop.f32.mrb[0].mxu0
    %v689 = vadd.f32 0.0, %v688
    %690 = vmatprep.mubr.f32.mxu0 0.0
    %691 = vmatmul.mubr.f32.gmra.mrb[0].mxu0 %v286
    %v692 = vpop.f32.mrb[0].mxu0
    %v693 = vadd.f32 0.0, %v692
    %v694 = vpop.f32.mrb[0].mxu0
    %v695 = vadd.f32 0.0, %v694
    %696 = vmatprep.mubr.f32.mxu0 0.0
    %697 = vmatmul.mubr.f32.gmra.mrb[0].mxu0 %v289
    %v698 = vpop.f32.mrb[0].mxu0
    %v699 = vadd.f32 0.0, %v698
    %v700 = vpop.f32.mrb[0].mxu0
    %v701 = vadd.f32 0.0, %v700
    %702 = vmatprep.mubr.f32.mxu0 0.0
    %703 = vmatmul.mubr.f32.gmra.mrb[0].mxu0 %v292
    %v704 = vpop.f32.mrb[0].mxu0
    %v705 = vadd.f32 0.0, %v704
    %v706 = vpop.f32.mrb[0].mxu0
    %v707 = vadd.f32 0.0, %v706
    %708 = vmatprep.mubr.f32.mxu0 0.0
    %709 = vmatmul.mubr.f32.gmra.mrb[0].mxu0 %v295
    %v710 = vpop.f32.mrb[0].mxu0
    %v711 = vadd.f32 0.0, %v710
    %v712 = vpop.f32.mrb[0].mxu0
    %v713 = vadd.f32 0.0, %v712
    %714 = vmatprep.mubr.f32.mxu0 0.0
    %715 = vmatmul.mubr.f32.gmra.mrb[0].mxu0 %v298
    %v716 = vpop.f32.mrb[0].mxu0
    %v717 = vadd.f32 0.0, %v716
    %v718 = vpop.f32.mrb[0].mxu0
    %v719 = vadd.f32 0.0, %v718
    %720 = vmatprep.mubr.f32.mxu0 0.0
    %721 = vmatmul.mubr.f32.gmra.mrb[0].mxu0 %v301
    %v722 = vpop.f32.mrb[0].mxu0
    %v723 = vadd.f32 0.0, %v722
    %v724 = vpop.f32.mrb[0].mxu0
    %v725 = vadd.f32 0.0, %v724
    %726 = vmatprep.mubr.f32.mxu0 0.0
    %727 = vmatmul.mubr.f32.gmra.mrb[0].mxu0 %v304
    %v728 = vpop.f32.mrb[0].mxu0
    %v729 = vadd.f32 0.0, %v728
    %v730 = vpop.f32.mrb[0].mxu0
    %v731 = vadd.f32 0.0, %v730
    %732 = vmatprep.mubr.f32.mxu0 0.0
    %733 = vmatmul.mubr.f32.gmra.mrb[0].mxu0 %v307
    %v734 = vpop.f32.mrb[0].mxu0
    %v735 = vadd.f32 0.0, %v734
    %v736 = vpop.f32.mrb[0].mxu0
    %v737 = vadd.f32 0.0, %v736
    %738 = vmatprep.mubr.f32.mxu0 0.0
    %739 = vmatmul.mubr.f32.gmra.mrb[0].mxu0 %v310
    %v740 = vpop.f32.mrb[0].mxu0
    %v741 = vadd.f32 0.0, %v740
    %v742 = vpop.f32.mrb[0].mxu0
    %v743 = vadd.f32 0.0, %v742
    %744 = vmatprep.mubr.f32.mxu0 0.0
    %745 = vmatmul.mubr.f32.gmra.mrb[0].mxu0 %v313
    %v746 = vpop.f32.mrb[0].mxu0
    %v747 = vadd.f32 0.0, %v746
    %v748 = vpop.f32.mrb[0].mxu0
    %v749 = vadd.f32 0.0, %v748
    %750 = vmatprep.mubr.f32.mxu0 0.0
    %751 = vmatmul.mubr.f32.gmra.mrb[0].mxu0 %v316
    %v752 = vpop.f32.mrb[0].mxu0
    %v753 = vadd.f32 0.0, %v752
    %v754 = vpop.f32.mrb[0].mxu0
    %v755 = vadd.f32 0.0, %v754
    %756 = vmatprep.mubr.f32.mxu0 0.0
    %757 = vmatmul.mubr.f32.gmra.mrb[0].mxu0 %v319
    %v758 = vpop.f32.mrb[0].mxu0
    %v759 = vadd.f32 0.0, %v758
    %v760 = vpop.f32.mrb[0].mxu0
    %v761 = vadd.f32 0.0, %v760
    %762 = vmatprep.mubr.f32.mxu0 0.0
    %763 = vmatmul.mubr.f32.gmra.mrb[0].mxu0 %v322
    %v764 = vpop.f32.mrb[0].mxu0
    %v765 = vadd.f32 0.0, %v764
    %v766 = vpop.f32.mrb[0].mxu0
    %v767 = vadd.f32 0.0, %v766
    %768 = vmatprep.mubr.f32.mxu0 0.0
    %769 = vmatmul.mubr.f32.gmra.mrb[0].mxu0 %v325
    %v770 = vpop.f32.mrb[0].mxu0
    %v771 = vadd.f32 0.0, %v770
    %v772 = vpop.f32.mrb[0].mxu0
    %v773 = vadd.f32 0.0, %v772
    %774 = vmatprep.mubr.f32.mxu0 0.0
    %775 = vmatmul.mubr.f32.gmra.mrb[0].mxu0 %v328
    %v776 = vpop.f32.mrb[0].mxu0
    %v777 = vadd.f32 0.0, %v776
    %v778 = vpop.f32.mrb[0].mxu0
    %v779 = vadd.f32 0.0, %v778
    %780 = vmatprep.mubr.f32.mxu0 0.0
    %781 = vmatmul.mubr.f32.gmra.mrb[0].mxu0 %v331
    %v782 = vpop.f32.mrb[0].mxu0
    %v783 = vadd.f32 0.0, %v782
    %v784 = vpop.f32.mrb[0].mxu0
    %v785 = vadd.f32 0.0, %v784
    %786 = vmatprep.mubr.f32.mxu0 0.0
    %787 = vmatmul.mubr.f32.gmra.mrb[0].mxu0 %v334
    %v788 = vpop.f32.mrb[0].mxu0
    %v789 = vadd.f32 0.0, %v788
    %v790 = vpop.f32.mrb[0].mxu0
    %v791 = vadd.f32 0.0, %v790
    %792 = vmatprep.mubr.f32.mxu0 0.0
    %793 = vmatmul.mubr.f32.gmra.mrb[0].mxu0 %v337
    %v794 = vpop.f32.mrb[0].mxu0
    %v795 = vadd.f32 0.0, %v794
    %v796 = vpop.f32.mrb[0].mxu0
    %v797 = vadd.f32 0.0, %v796
    %798 = vmatprep.mubr.f32.mxu0 0.0
    %799 = vmatmul.mubr.f32.gmra.mrb[0].mxu0 %v340
    %v800 = vpop.f32.mrb[0].mxu0
    %v801 = vadd.f32 0.0, %v800
    %v802 = vpop.f32.mrb[0].mxu0
    %v803 = vadd.f32 0.0, %v802
    %804 = vmatprep.mubr.f32.mxu0 0.0
    %805 = vmatmul.mubr.f32.gmra.mrb[0].mxu0 %v343
    %v806 = vpop.f32.mrb[0].mxu0
    %v807 = vadd.f32 0.0, %v806
    %v808 = vpop.f32.mrb[0].mxu0
    %v809 = vadd.f32 0.0, %v808
    %810 = vdwg.mxu0
    %811 = vmatprep.subr.mxu0 %v189
    %812 = vmatpush1.msra.mxu0 %v187
    %813 = vmatprep.subr.mxu0 %v195
    %814 = vmatpush1.msra.mxu0 %v193
    %815 = vmatprep.subr.mxu0 0.0
    %816 = vmatpush1.msra.mxu0 0.0
    %817 = vmatprep.subr.mxu0 0.0
    %818 = vmatpush1.msra.mxu0 0.0
    %819 = vmatprep.subr.mxu0 0.0
    %820 = vmatpush1.msra.mxu0 0.0
    %821 = vmatprep.subr.mxu0 0.0
    %822 = vmatpush1.msra.mxu0 0.0
    %823 = vmatprep.subr.mxu0 0.0
    %824 = vmatpush1.msra.mxu0 0.0
    %825 = vmatprep.subr.mxu0 0.0
    %826 = vmatpush1.msra.mxu0 0.0
    %827 = vmatprep.subr.mxu0 0.0
    %828 = vmatpush1.msra.mxu0 0.0
    %829 = vmatprep.subr.mxu0 0.0
    %830 = vmatpush1.msra.mxu0 0.0
    %831 = vmatprep.subr.mxu0 0.0
    %832 = vmatpush1.msra.mxu0 0.0
    %833 = vmatprep.subr.mxu0 0.0
    %834 = vmatpush1.msra.mxu0 0.0
    %835 = vmatprep.subr.mxu0 0.0
    %836 = vmatpush1.msra.mxu0 0.0
    %837 = vmatprep.subr.mxu0 0.0
    %838 = vmatpush1.msra.mxu0 0.0
    %839 = vmatprep.subr.mxu0 0.0
    %840 = vmatpush1.msra.mxu0 0.0
    %841 = vmatprep.subr.mxu0 0.0
    %842 = vmatpush1.msra.mxu0 0.0
    %843 = vmatprep.subr.mxu0 0.0
    %844 = vmatpush1.msra.mxu0 0.0
    %845 = vmatprep.subr.mxu0 0.0
    %846 = vmatpush1.msra.mxu0 0.0
    %847 = vmatprep.subr.mxu0 0.0
    %848 = vmatpush1.msra.mxu0 0.0
    %849 = vmatprep.subr.mxu0 0.0
    %850 = vmatpush1.msra.mxu0 0.0
    %851 = vmatprep.subr.mxu0 0.0
    %852 = vmatpush1.msra.mxu0 0.0
    %853 = vmatprep.subr.mxu0 0.0
    %854 = vmatpush1.msra.mxu0 0.0
    %855 = vmatprep.subr.mxu0 0.0
    %856 = vmatpush1.msra.mxu0 0.0
    %857 = vmatprep.subr.mxu0 0.0
    %858 = vmatpush1.msra.mxu0 0.0
    %859 = vmatprep.subr.mxu0 0.0
    %860 = vmatpush1.msra.mxu0 0.0
    %861 = vmatprep.subr.mxu0 0.0
    %862 = vmatpush1.msra.mxu0 0.0
    %863 = vmatprep.subr.mxu0 0.0
    %864 = vmatpush1.msra.mxu0 0.0
    %865 = vmatprep.subr.mxu0 0.0
    %866 = vmatpush1.msra.mxu0 0.0
    %867 = vmatprep.subr.mxu0 0.0
    %868 = vmatpush1.msra.mxu0 0.0
    %869 = vmatprep.subr.mxu0 0.0
    %870 = vmatpush1.msra.mxu0 0.0
    %871 = vmatprep.subr.mxu0 0.0
    %872 = vmatpush1.msra.mxu0 0.0
    %873 = vmatprep.subr.mxu0 0.0
    %874 = vmatpush1.msra.mxu0 0.0
    %875 = vmatprep.mubr.f32.mxu0 0.0
    %876 = vmatmul.mubr.f32.gmra.mrb[0].mxu0 %v262
    %v877 = vpop.f32.mrb[0].mxu0
    %v878 = vadd.f32 0.0, %v877
    %v879 = vpop.f32.mrb[0].mxu0
    %v880 = vadd.f32 0.0, %v879
    %881 = vmatprep.mubr.f32.mxu0 0.0
    %882 = vmatmul.mubr.f32.gmra.mrb[0].mxu0 %v265
    %v883 = vpop.f32.mrb[0].mxu0
    %v884 = vadd.f32 0.0, %v883
    %v885 = vpop.f32.mrb[0].mxu0
    %v886 = vadd.f32 0.0, %v885
    %887 = vmatprep.mubr.f32.mxu0 0.0
    %888 = vmatmul.mubr.f32.gmra.mrb[0].mxu0 %v268
    %v889 = vpop.f32.mrb[0].mxu0
    %v890 = vadd.f32 0.0, %v889
    %v891 = vpop.f32.mrb[0].mxu0
    %v892 = vadd.f32 0.0, %v891
    %893 = vmatprep.mubr.f32.mxu0 0.0
    %894 = vmatmul.mubr.f32.gmra.mrb[0].mxu0 %v271
    %v895 = vpop.f32.mrb[0].mxu0
    %v896 = vadd.f32 0.0, %v895
    %v897 = vpop.f32.mrb[0].mxu0
    %v898 = vadd.f32 0.0, %v897
    %899 = vmatprep.mubr.f32.mxu0 0.0
    %900 = vmatmul.mubr.f32.gmra.mrb[0].mxu0 %v274
    %v901 = vpop.f32.mrb[0].mxu0
    %v902 = vadd.f32 0.0, %v901
    %v903 = vpop.f32.mrb[0].mxu0
    %v904 = vadd.f32 0.0, %v903
    %905 = vmatprep.mubr.f32.mxu0 0.0
    %906 = vmatmul.mubr.f32.gmra.mrb[0].mxu0 %v277
    %v907 = vpop.f32.mrb[0].mxu0
    %v908 = vadd.f32 0.0, %v907
    %v909 = vpop.f32.mrb[0].mxu0
    %v910 = vadd.f32 0.0, %v909
    %911 = vmatprep.mubr.f32.mxu0 0.0
    %912 = vmatmul.mubr.f32.gmra.mrb[0].mxu0 %v280
    %v913 = vpop.f32.mrb[0].mxu0
    %v914 = vadd.f32 0.0, %v913
    %v915 = vpop.f32.mrb[0].mxu0
    %v916 = vadd.f32 0.0, %v915
    %917 = vmatprep.mubr.f32.mxu0 0.0
    %918 = vmatmul.mubr.f32.gmra.mrb[0].mxu0 %v283
    %v919 = vpop.f32.mrb[0].mxu0
    %v920 = vadd.f32 0.0, %v919
    %v921 = vpop.f32.mrb[0].mxu0
    %v922 = vadd.f32 0.0, %v921
    %923 = vmatprep.mubr.f32.mxu0 0.0
    %924 = vmatmul.mubr.f32.gmra.mrb[0].mxu0 %v286
    %v925 = vpop.f32.mrb[0].mxu0
    %v926 = vadd.f32 0.0, %v925
    %v927 = vpop.f32.mrb[0].mxu0
    %v928 = vadd.f32 0.0, %v927
    %929 = vmatprep.mubr.f32.mxu0 0.0
    %930 = vmatmul.mubr.f32.gmra.mrb[0].mxu0 %v289
    %v931 = vpop.f32.mrb[0].mxu0
    %v932 = vadd.f32 0.0, %v931
    %v933 = vpop.f32.mrb[0].mxu0
    %v934 = vadd.f32 0.0, %v933
    %935 = vmatprep.mubr.f32.mxu0 0.0
    %936 = vmatmul.mubr.f32.gmra.mrb[0].mxu0 %v292
    %v937 = vpop.f32.mrb[0].mxu0
    %v938 = vadd.f32 0.0, %v937
    %v939 = vpop.f32.mrb[0].mxu0
    %v940 = vadd.f32 0.0, %v939
    %941 = vmatprep.mubr.f32.mxu0 0.0
    %942 = vmatmul.mubr.f32.gmra.mrb[0].mxu0 %v295
    %v943 = vpop.f32.mrb[0].mxu0
    %v944 = vadd.f32 0.0, %v943
    %v945 = vpop.f32.mrb[0].mxu0
    %v946 = vadd.f32 0.0, %v945
    %947 = vmatprep.mubr.f32.mxu0 0.0
    %948 = vmatmul.mubr.f32.gmra.mrb[0].mxu0 %v298
    %v949 = vpop.f32.mrb[0].mxu0
    %v950 = vadd.f32 0.0, %v949
    %v951 = vpop.f32.mrb[0].mxu0
    %v952 = vadd.f32 0.0, %v951
    %953 = vmatprep.mubr.f32.mxu0 0.0
    %954 = vmatmul.mubr.f32.gmra.mrb[0].mxu0 %v301
    %v955 = vpop.f32.mrb[0].mxu0
    %v956 = vadd.f32 0.0, %v955
    %v957 = vpop.f32.mrb[0].mxu0
    %v958 = vadd.f32 0.0, %v957
    %959 = vmatprep.mubr.f32.mxu0 0.0
    %960 = vmatmul.mubr.f32.gmra.mrb[0].mxu0 %v304
    %v961 = vpop.f32.mrb[0].mxu0
    %v962 = vadd.f32 0.0, %v961
    %v963 = vpop.f32.mrb[0].mxu0
    %v964 = vadd.f32 0.0, %v963
    %965 = vmatprep.mubr.f32.mxu0 0.0
    %966 = vmatmul.mubr.f32.gmra.mrb[0].mxu0 %v307
    %v967 = vpop.f32.mrb[0].mxu0
    %v968 = vadd.f32 0.0, %v967
    %v969 = vpop.f32.mrb[0].mxu0
    %v970 = vadd.f32 0.0, %v969
    %971 = vmatprep.mubr.f32.mxu0 0.0
    %972 = vmatmul.mubr.f32.gmra.mrb[0].mxu0 %v310
    %v973 = vpop.f32.mrb[0].mxu0
    %v974 = vadd.f32 0.0, %v973
    %v975 = vpop.f32.mrb[0].mxu0
    %v976 = vadd.f32 0.0, %v975
    %977 = vmatprep.mubr.f32.mxu0 0.0
    %978 = vmatmul.mubr.f32.gmra.mrb[0].mxu0 %v313
    %v979 = vpop.f32.mrb[0].mxu0
    %v980 = vadd.f32 0.0, %v979
    %v981 = vpop.f32.mrb[0].mxu0
    %v982 = vadd.f32 0.0, %v981
    %983 = vmatprep.mubr.f32.mxu0 0.0
    %984 = vmatmul.mubr.f32.gmra.mrb[0].mxu0 %v316
    %v985 = vpop.f32.mrb[0].mxu0
    %v986 = vadd.f32 0.0, %v985
    %v987 = vpop.f32.mrb[0].mxu0
    %v988 = vadd.f32 0.0, %v987
    %989 = vmatprep.mubr.f32.mxu0 0.0
    %990 = vmatmul.mubr.f32.gmra.mrb[0].mxu0 %v319
    %v991 = vpop.f32.mrb[0].mxu0
    %v992 = vadd.f32 0.0, %v991
    %v993 = vpop.f32.mrb[0].mxu0
    %v994 = vadd.f32 0.0, %v993
    %995 = vmatprep.mubr.f32.mxu0 0.0
    %996 = vmatmul.mubr.f32.gmra.mrb[0].mxu0 %v322
    %v997 = vpop.f32.mrb[0].mxu0
    %v998 = vadd.f32 0.0, %v997
    %v999 = vpop.f32.mrb[0].mxu0
    %v1000 = vadd.f32 0.0, %v999
    %1001 = vmatprep.mubr.f32.mxu0 0.0
    %1002 = vmatmul.mubr.f32.gmra.mrb[0].mxu0 %v325
    %v1003 = vpop.f32.mrb[0].mxu0
    %v1004 = vadd.f32 0.0, %v1003
    %v1005 = vpop.f32.mrb[0].mxu0
    %v1006 = vadd.f32 0.0, %v1005
    %1007 = vmatprep.mubr.f32.mxu0 0.0
    %1008 = vmatmul.mubr.f32.gmra.mrb[0].mxu0 %v328
    %v1009 = vpop.f32.mrb[0].mxu0
    %v1010 = vadd.f32 0.0, %v1009
    %v1011 = vpop.f32.mrb[0].mxu0
    %v1012 = vadd.f32 0.0, %v1011
    %1013 = vmatprep.mubr.f32.mxu0 0.0
    %1014 = vmatmul.mubr.f32.gmra.mrb[0].mxu0 %v331
    %v1015 = vpop.f32.mrb[0].mxu0
    %v1016 = vadd.f32 0.0, %v1015
    %v1017 = vpop.f32.mrb[0].mxu0
    %v1018 = vadd.f32 0.0, %v1017
    %1019 = vmatprep.mubr.f32.mxu0 0.0
    %1020 = vmatmul.mubr.f32.gmra.mrb[0].mxu0 %v334
    %v1021 = vpop.f32.mrb[0].mxu0
    %v1022 = vadd.f32 0.0, %v1021
    %v1023 = vpop.f32.mrb[0].mxu0
    %v1024 = vadd.f32 0.0, %v1023
    %1025 = vmatprep.mubr.f32.mxu0 0.0
    %1026 = vmatmul.mubr.f32.gmra.mrb[0].mxu0 %v337
    %v1027 = vpop.f32.mrb[0].mxu0
    %v1028 = vadd.f32 0.0, %v1027
    %v1029 = vpop.f32.mrb[0].mxu0
    %v1030 = vadd.f32 0.0, %v1029
    %1031 = vmatprep.mubr.f32.mxu0 0.0
    %1032 = vmatmul.mubr.f32.gmra.mrb[0].mxu0 %v340
    %v1033 = vpop.f32.mrb[0].mxu0
    %v1034 = vadd.f32 0.0, %v1033
    %v1035 = vpop.f32.mrb[0].mxu0
    %v1036 = vadd.f32 0.0, %v1035
    %1037 = vmatprep.mubr.f32.mxu0 0.0
    %1038 = vmatmul.mubr.f32.gmra.mrb[0].mxu0 %v343
    %v1039 = vpop.f32.mrb[0].mxu0
    %v1040 = vadd.f32 0.0, %v1039
    %v1041 = vpop.f32.mrb[0].mxu0
    %v1042 = vadd.f32 0.0, %v1041
    %1043 = vdwg.mxu0
    %1044 = vmatprep.subr.mxu0 %v201
    %1045 = vmatpush1.msra.mxu0 %v199
    %1046 = vmatprep.subr.mxu0 %v207
    %1047 = vmatpush1.msra.mxu0 %v205
    %1048 = vmatprep.subr.mxu0 0.0
    %1049 = vmatpush1.msra.mxu0 0.0
    %1050 = vmatprep.subr.mxu0 0.0
    %1051 = vmatpush1.msra.mxu0 0.0
    %1052 = vmatprep.subr.mxu0 0.0
    %1053 = vmatpush1.msra.mxu0 0.0
    %1054 = vmatprep.subr.mxu0 0.0
    %1055 = vmatpush1.msra.mxu0 0.0
    %1056 = vmatprep.subr.mxu0 0.0
    %1057 = vmatpush1.msra.mxu0 0.0
    %1058 = vmatprep.subr.mxu0 0.0
    %1059 = vmatpush1.msra.mxu0 0.0
    %1060 = vmatprep.subr.mxu0 0.0
    %1061 = vmatpush1.msra.mxu0 0.0
    %1062 = vmatprep.subr.mxu0 0.0
    %1063 = vmatpush1.msra.mxu0 0.0
    %1064 = vmatprep.subr.mxu0 0.0
    %1065 = vmatpush1.msra.mxu0 0.0
    %1066 = vmatprep.subr.mxu0 0.0
    %1067 = vmatpush1.msra.mxu0 0.0
    %1068 = vmatprep.subr.mxu0 0.0
    %1069 = vmatpush1.msra.mxu0 0.0
    %1070 = vmatprep.subr.mxu0 0.0
    %1071 = vmatpush1.msra.mxu0 0.0
    %1072 = vmatprep.subr.mxu0 0.0
    %1073 = vmatpush1.msra.mxu0 0.0
    %1074 = vmatprep.subr.mxu0 0.0
    %1075 = vmatpush1.msra.mxu0 0.0
    %1076 = vmatprep.subr.mxu0 0.0
    %1077 = vmatpush1.msra.mxu0 0.0
    %1078 = vmatprep.subr.mxu0 0.0
    %1079 = vmatpush1.msra.mxu0 0.0
    %1080 = vmatprep.subr.mxu0 0.0
    %1081 = vmatpush1.msra.mxu0 0.0
    %1082 = vmatprep.subr.mxu0 0.0
    %1083 = vmatpush1.msra.mxu0 0.0
    %1084 = vmatprep.subr.mxu0 0.0
    %1085 = vmatpush1.msra.mxu0 0.0
    %1086 = vmatprep.subr.mxu0 0.0
    %1087 = vmatpush1.msra.mxu0 0.0
    %1088 = vmatprep.subr.mxu0 0.0
    %1089 = vmatpush1.msra.mxu0 0.0
    %1090 = vmatprep.subr.mxu0 0.0
    %1091 = vmatpush1.msra.mxu0 0.0
    %1092 = vmatprep.subr.mxu0 0.0
    %1093 = vmatpush1.msra.mxu0 0.0
    %1094 = vmatprep.subr.mxu0 0.0
    %1095 = vmatpush1.msra.mxu0 0.0
    %1096 = vmatprep.subr.mxu0 0.0
    %1097 = vmatpush1.msra.mxu0 0.0
    %1098 = vmatprep.subr.mxu0 0.0
    %1099 = vmatpush1.msra.mxu0 0.0
    %1100 = vmatprep.subr.mxu0 0.0
    %1101 = vmatpush1.msra.mxu0 0.0
    %1102 = vmatprep.subr.mxu0 0.0
    %1103 = vmatpush1.msra.mxu0 0.0
    %1104 = vmatprep.subr.mxu0 0.0
    %1105 = vmatpush1.msra.mxu0 0.0
    %1106 = vmatprep.subr.mxu0 0.0
    %1107 = vmatpush1.msra.mxu0 0.0
    %1108 = vmatprep.mubr.f32.mxu0 0.0
    %1109 = vmatmul.mubr.f32.gmra.mrb[0].mxu0 %v262
    %v1110 = vpop.f32.mrb[0].mxu0
    %v1111 = vadd.f32 0.0, %v1110
    %v1112 = vpop.f32.mrb[0].mxu0
    %v1113 = vadd.f32 0.0, %v1112
    %1114 = vmatprep.mubr.f32.mxu0 0.0
    %1115 = vmatmul.mubr.f32.gmra.mrb[0].mxu0 %v265
    %v1116 = vpop.f32.mrb[0].mxu0
    %v1117 = vadd.f32 0.0, %v1116
    %v1118 = vpop.f32.mrb[0].mxu0
    %v1119 = vadd.f32 0.0, %v1118
    %1120 = vmatprep.mubr.f32.mxu0 0.0
    %1121 = vmatmul.mubr.f32.gmra.mrb[0].mxu0 %v268
    %v1122 = vpop.f32.mrb[0].mxu0
    %v1123 = vadd.f32 0.0, %v1122
    %v1124 = vpop.f32.mrb[0].mxu0
    %v1125 = vadd.f32 0.0, %v1124
    %1126 = vmatprep.mubr.f32.mxu0 0.0
    %1127 = vmatmul.mubr.f32.gmra.mrb[0].mxu0 %v271
    %v1128 = vpop.f32.mrb[0].mxu0
    %v1129 = vadd.f32 0.0, %v1128
    %v1130 = vpop.f32.mrb[0].mxu0
    %v1131 = vadd.f32 0.0, %v1130
    %1132 = vmatprep.mubr.f32.mxu0 0.0
    %1133 = vmatmul.mubr.f32.gmra.mrb[0].mxu0 %v274
    %v1134 = vpop.f32.mrb[0].mxu0
    %v1135 = vadd.f32 0.0, %v1134
    %v1136 = vpop.f32.mrb[0].mxu0
    %v1137 = vadd.f32 0.0, %v1136
    %1138 = vmatprep.mubr.f32.mxu0 0.0
    %1139 = vmatmul.mubr.f32.gmra.mrb[0].mxu0 %v277
    %v1140 = vpop.f32.mrb[0].mxu0
    %v1141 = vadd.f32 0.0, %v1140
    %v1142 = vpop.f32.mrb[0].mxu0
    %v1143 = vadd.f32 0.0, %v1142
    %1144 = vmatprep.mubr.f32.mxu0 0.0
    %1145 = vmatmul.mubr.f32.gmra.mrb[0].mxu0 %v280
    %v1146 = vpop.f32.mrb[0].mxu0
    %v1147 = vadd.f32 0.0, %v1146
    %v1148 = vpop.f32.mrb[0].mxu0
    %v1149 = vadd.f32 0.0, %v1148
    %1150 = vmatprep.mubr.f32.mxu0 0.0
    %1151 = vmatmul.mubr.f32.gmra.mrb[0].mxu0 %v283
    %v1152 = vpop.f32.mrb[0].mxu0
    %v1153 = vadd.f32 0.0, %v1152
    %v1154 = vpop.f32.mrb[0].mxu0
    %v1155 = vadd.f32 0.0, %v1154
    %1156 = vmatprep.mubr.f32.mxu0 0.0
    %1157 = vmatmul.mubr.f32.gmra.mrb[0].mxu0 %v286
    %v1158 = vpop.f32.mrb[0].mxu0
    %v1159 = vadd.f32 0.0, %v1158
    %v1160 = vpop.f32.mrb[0].mxu0
    %v1161 = vadd.f32 0.0, %v1160
    %1162 = vmatprep.mubr.f32.mxu0 0.0
    %1163 = vmatmul.mubr.f32.gmra.mrb[0].mxu0 %v289
    %v1164 = vpop.f32.mrb[0].mxu0
    %v1165 = vadd.f32 0.0, %v1164
    %v1166 = vpop.f32.mrb[0].mxu0
    %v1167 = vadd.f32 0.0, %v1166
    %1168 = vmatprep.mubr.f32.mxu0 0.0
    %1169 = vmatmul.mubr.f32.gmra.mrb[0].mxu0 %v292
    %v1170 = vpop.f32.mrb[0].mxu0
    %v1171 = vadd.f32 0.0, %v1170
    %v1172 = vpop.f32.mrb[0].mxu0
    %v1173 = vadd.f32 0.0, %v1172
    %1174 = vmatprep.mubr.f32.mxu0 0.0
    %1175 = vmatmul.mubr.f32.gmra.mrb[0].mxu0 %v295
    %v1176 = vpop.f32.mrb[0].mxu0
    %v1177 = vadd.f32 0.0, %v1176
    %v1178 = vpop.f32.mrb[0].mxu0
    %v1179 = vadd.f32 0.0, %v1178
    %1180 = vmatprep.mubr.f32.mxu0 0.0
    %1181 = vmatmul.mubr.f32.gmra.mrb[0].mxu0 %v298
    %v1182 = vpop.f32.mrb[0].mxu0
    %v1183 = vadd.f32 0.0, %v1182
    %v1184 = vpop.f32.mrb[0].mxu0
    %v1185 = vadd.f32 0.0, %v1184
    %1186 = vmatprep.mubr.f32.mxu0 0.0
    %1187 = vmatmul.mubr.f32.gmra.mrb[0].mxu0 %v301
    %v1188 = vpop.f32.mrb[0].mxu0
    %v1189 = vadd.f32 0.0, %v1188
    %v1190 = vpop.f32.mrb[0].mxu0
    %v1191 = vadd.f32 0.0, %v1190
    %1192 = vmatprep.mubr.f32.mxu0 0.0
    %1193 = vmatmul.mubr.f32.gmra.mrb[0].mxu0 %v304
    %v1194 = vpop.f32.mrb[0].mxu0
    %v1195 = vadd.f32 0.0, %v1194
    %v1196 = vpop.f32.mrb[0].mxu0
    %v1197 = vadd.f32 0.0, %v1196
    %1198 = vmatprep.mubr.f32.mxu0 0.0
    %1199 = vmatmul.mubr.f32.gmra.mrb[0].mxu0 %v307
    %v1200 = vpop.f32.mrb[0].mxu0
    %v1201 = vadd.f32 0.0, %v1200
    %v1202 = vpop.f32.mrb[0].mxu0
    %v1203 = vadd.f32 0.0, %v1202
    %1204 = vmatprep.mubr.f32.mxu0 0.0
    %1205 = vmatmul.mubr.f32.gmra.mrb[0].mxu0 %v310
    %v1206 = vpop.f32.mrb[0].mxu0
    %v1207 = vadd.f32 0.0, %v1206
    %v1208 = vpop.f32.mrb[0].mxu0
    %v1209 = vadd.f32 0.0, %v1208
    %1210 = vmatprep.mubr.f32.mxu0 0.0
    %1211 = vmatmul.mubr.f32.gmra.mrb[0].mxu0 %v313
    %v1212 = vpop.f32.mrb[0].mxu0
    %v1213 = vadd.f32 0.0, %v1212
    %v1214 = vpop.f32.mrb[0].mxu0
    %v1215 = vadd.f32 0.0, %v1214
    %1216 = vmatprep.mubr.f32.mxu0 0.0
    %1217 = vmatmul.mubr.f32.gmra.mrb[0].mxu0 %v316
    %v1218 = vpop.f32.mrb[0].mxu0
    %v1219 = vadd.f32 0.0, %v1218
    %v1220 = vpop.f32.mrb[0].mxu0
    %v1221 = vadd.f32 0.0, %v1220
    %1222 = vmatprep.mubr.f32.mxu0 0.0
    %1223 = vmatmul.mubr.f32.gmra.mrb[0].mxu0 %v319
    %v1224 = vpop.f32.mrb[0].mxu0
    %v1225 = vadd.f32 0.0, %v1224
    %v1226 = vpop.f32.mrb[0].mxu0
    %v1227 = vadd.f32 0.0, %v1226
    %1228 = vmatprep.mubr.f32.mxu0 0.0
    %1229 = vmatmul.mubr.f32.gmra.mrb[0].mxu0 %v322
    %v1230 = vpop.f32.mrb[0].mxu0
    %v1231 = vadd.f32 0.0, %v1230
    %v1232 = vpop.f32.mrb[0].mxu0
    %v1233 = vadd.f32 0.0, %v1232
    %1234 = vmatprep.mubr.f32.mxu0 0.0
    %1235 = vmatmul.mubr.f32.gmra.mrb[0].mxu0 %v325
    %v1236 = vpop.f32.mrb[0].mxu0
    %v1237 = vadd.f32 0.0, %v1236
    %v1238 = vpop.f32.mrb[0].mxu0
    %v1239 = vadd.f32 0.0, %v1238
    %1240 = vmatprep.mubr.f32.mxu0 0.0
    %1241 = vmatmul.mubr.f32.gmra.mrb[0].mxu0 %v328
    %v1242 = vpop.f32.mrb[0].mxu0
    %v1243 = vadd.f32 0.0, %v1242
    %v1244 = vpop.f32.mrb[0].mxu0
    %v1245 = vadd.f32 0.0, %v1244
    %1246 = vmatprep.mubr.f32.mxu0 0.0
    %1247 = vmatmul.mubr.f32.gmra.mrb[0].mxu0 %v331
    %v1248 = vpop.f32.mrb[0].mxu0
    %v1249 = vadd.f32 0.0, %v1248
    %v1250 = vpop.f32.mrb[0].mxu0
    %v1251 = vadd.f32 0.0, %v1250
    %1252 = vmatprep.mubr.f32.mxu0 0.0
    %1253 = vmatmul.mubr.f32.gmra.mrb[0].mxu0 %v334
    %v1254 = vpop.f32.mrb[0].mxu0
    %v1255 = vadd.f32 0.0, %v1254
    %v1256 = vpop.f32.mrb[0].mxu0
    %v1257 = vadd.f32 0.0, %v1256
    %1258 = vmatprep.mubr.f32.mxu0 0.0
    %1259 = vmatmul.mubr.f32.gmra.mrb[0].mxu0 %v337
    %v1260 = vpop.f32.mrb[0].mxu0
    %v1261 = vadd.f32 0.0, %v1260
    %v1262 = vpop.f32.mrb[0].mxu0
    %v1263 = vadd.f32 0.0, %v1262
    %1264 = vmatprep.mubr.f32.mxu0 0.0
    %1265 = vmatmul.mubr.f32.gmra.mrb[0].mxu0 %v340
    %v1266 = vpop.f32.mrb[0].mxu0
    %v1267 = vadd.f32 0.0, %v1266
    %v1268 = vpop.f32.mrb[0].mxu0
    %v1269 = vadd.f32 0.0, %v1268
    %1270 = vmatprep.mubr.f32.mxu0 0.0
    %1271 = vmatmul.mubr.f32.gmra.mrb[0].mxu0 %v343
    %v1272 = vpop.f32.mrb[0].mxu0
    %v1273 = vadd.f32 0.0, %v1272
    %v1274 = vpop.f32.mrb[0].mxu0
    %v1275 = vadd.f32 0.0, %v1274
    %1276 = vdwg.mxu0
    %1277 = vmatprep.subr.mxu0 %v213
    %1278 = vmatpush1.msra.mxu0 %v211
    %1279 = vmatprep.subr.mxu0 %v219
    %1280 = vmatpush1.msra.mxu0 %v217
    %1281 = vmatprep.subr.mxu0 0.0
    %1282 = vmatpush1.msra.mxu0 0.0
    %1283 = vmatprep.subr.mxu0 0.0
    %1284 = vmatpush1.msra.mxu0 0.0
    %1285 = vmatprep.subr.mxu0 0.0
    %1286 = vmatpush1.msra.mxu0 0.0
    %1287 = vmatprep.subr.mxu0 0.0
    %1288 = vmatpush1.msra.mxu0 0.0
    %1289 = vmatprep.subr.mxu0 0.0
    %1290 = vmatpush1.msra.mxu0 0.0
    %1291 = vmatprep.subr.mxu0 0.0
    %1292 = vmatpush1.msra.mxu0 0.0
    %1293 = vmatprep.subr.mxu0 0.0
    %1294 = vmatpush1.msra.mxu0 0.0
    %1295 = vmatprep.subr.mxu0 0.0
    %1296 = vmatpush1.msra.mxu0 0.0
    %1297 = vmatprep.subr.mxu0 0.0
    %1298 = vmatpush1.msra.mxu0 0.0
    %1299 = vmatprep.subr.mxu0 0.0
    %1300 = vmatpush1.msra.mxu0 0.0
    %1301 = vmatprep.subr.mxu0 0.0
    %1302 = vmatpush1.msra.mxu0 0.0
    %1303 = vmatprep.subr.mxu0 0.0
    %1304 = vmatpush1.msra.mxu0 0.0
    %1305 = vmatprep.subr.mxu0 0.0
    %1306 = vmatpush1.msra.mxu0 0.0
    %1307 = vmatprep.subr.mxu0 0.0
    %1308 = vmatpush1.msra.mxu0 0.0
    %1309 = vmatprep.subr.mxu0 0.0
    %1310 = vmatpush1.msra.mxu0 0.0
    %1311 = vmatprep.subr.mxu0 0.0
    %1312 = vmatpush1.msra.mxu0 0.0
    %1313 = vmatprep.subr.mxu0 0.0
    %1314 = vmatpush1.msra.mxu0 0.0
    %1315 = vmatprep.subr.mxu0 0.0
    %1316 = vmatpush1.msra.mxu0 0.0
    %1317 = vmatprep.subr.mxu0 0.0
    %1318 = vmatpush1.msra.mxu0 0.0
    %1319 = vmatprep.subr.mxu0 0.0
    %1320 = vmatpush1.msra.mxu0 0.0
    %1321 = vmatprep.subr.mxu0 0.0
    %1322 = vmatpush1.msra.mxu0 0.0
    %1323 = vmatprep.subr.mxu0 0.0
    %1324 = vmatpush1.msra.mxu0 0.0
    %1325 = vmatprep.subr.mxu0 0.0
    %1326 = vmatpush1.msra.mxu0 0.0
    %1327 = vmatprep.subr.mxu0 0.0
    %1328 = vmatpush1.msra.mxu0 0.0
    %1329 = vmatprep.subr.mxu0 0.0
    %1330 = vmatpush1.msra.mxu0 0.0
    %1331 = vmatprep.subr.mxu0 0.0
    %1332 = vmatpush1.msra.mxu0 0.0
    %1333 = vmatprep.subr.mxu0 0.0
    %1334 = vmatpush1.msra.mxu0 0.0
    %1335 = vmatprep.subr.mxu0 0.0
    %1336 = vmatpush1.msra.mxu0 0.0
    %1337 = vmatprep.subr.mxu0 0.0
    %1338 = vmatpush1.msra.mxu0 0.0
    %1339 = vmatprep.subr.mxu0 0.0
    %1340 = vmatpush1.msra.mxu0 0.0
    %1341 = vmatprep.mubr.f32.mxu0 0.0
    %1342 = vmatmul.mubr.f32.gmra.mrb[0].mxu0 %v262
    %v1343 = vpop.f32.mrb[0].mxu0
    %v1344 = vadd.f32 0.0, %v1343
    %v1345 = vpop.f32.mrb[0].mxu0
    %v1346 = vadd.f32 0.0, %v1345
    %1347 = vmatprep.mubr.f32.mxu0 0.0
    %1348 = vmatmul.mubr.f32.gmra.mrb[0].mxu0 %v265
    %v1349 = vpop.f32.mrb[0].mxu0
    %v1350 = vadd.f32 0.0, %v1349
    %v1351 = vpop.f32.mrb[0].mxu0
    %v1352 = vadd.f32 0.0, %v1351
    %1353 = vmatprep.mubr.f32.mxu0 0.0
    %1354 = vmatmul.mubr.f32.gmra.mrb[0].mxu0 %v268
    %v1355 = vpop.f32.mrb[0].mxu0
    %v1356 = vadd.f32 0.0, %v1355
    %v1357 = vpop.f32.mrb[0].mxu0
    %v1358 = vadd.f32 0.0, %v1357
    %1359 = vmatprep.mubr.f32.mxu0 0.0
    %1360 = vmatmul.mubr.f32.gmra.mrb[0].mxu0 %v271
    %v1361 = vpop.f32.mrb[0].mxu0
    %v1362 = vadd.f32 0.0, %v1361
    %v1363 = vpop.f32.mrb[0].mxu0
    %v1364 = vadd.f32 0.0, %v1363
    %1365 = vmatprep.mubr.f32.mxu0 0.0
    %1366 = vmatmul.mubr.f32.gmra.mrb[0].mxu0 %v274
    %v1367 = vpop.f32.mrb[0].mxu0
    %v1368 = vadd.f32 0.0, %v1367
    %v1369 = vpop.f32.mrb[0].mxu0
    %v1370 = vadd.f32 0.0, %v1369
    %1371 = vmatprep.mubr.f32.mxu0 0.0
    %1372 = vmatmul.mubr.f32.gmra.mrb[0].mxu0 %v277
    %v1373 = vpop.f32.mrb[0].mxu0
    %v1374 = vadd.f32 0.0, %v1373
    %v1375 = vpop.f32.mrb[0].mxu0
    %v1376 = vadd.f32 0.0, %v1375
    %1377 = vmatprep.mubr.f32.mxu0 0.0
    %1378 = vmatmul.mubr.f32.gmra.mrb[0].mxu0 %v280
    %v1379 = vpop.f32.mrb[0].mxu0
    %v1380 = vadd.f32 0.0, %v1379
    %v1381 = vpop.f32.mrb[0].mxu0
    %v1382 = vadd.f32 0.0, %v1381
    %1383 = vmatprep.mubr.f32.mxu0 0.0
    %1384 = vmatmul.mubr.f32.gmra.mrb[0].mxu0 %v283
    %v1385 = vpop.f32.mrb[0].mxu0
    %v1386 = vadd.f32 0.0, %v1385
    %v1387 = vpop.f32.mrb[0].mxu0
    %v1388 = vadd.f32 0.0, %v1387
    %1389 = vmatprep.mubr.f32.mxu0 0.0
    %1390 = vmatmul.mubr.f32.gmra.mrb[0].mxu0 %v286
    %v1391 = vpop.f32.mrb[0].mxu0
    %v1392 = vadd.f32 0.0, %v1391
    %v1393 = vpop.f32.mrb[0].mxu0
    %v1394 = vadd.f32 0.0, %v1393
    %1395 = vmatprep.mubr.f32.mxu0 0.0
    %1396 = vmatmul.mubr.f32.gmra.mrb[0].mxu0 %v289
    %v1397 = vpop.f32.mrb[0].mxu0
    %v1398 = vadd.f32 0.0, %v1397
    %v1399 = vpop.f32.mrb[0].mxu0
    %v1400 = vadd.f32 0.0, %v1399
    %1401 = vmatprep.mubr.f32.mxu0 0.0
    %1402 = vmatmul.mubr.f32.gmra.mrb[0].mxu0 %v292
    %v1403 = vpop.f32.mrb[0].mxu0
    %v1404 = vadd.f32 0.0, %v1403
    %v1405 = vpop.f32.mrb[0].mxu0
    %v1406 = vadd.f32 0.0, %v1405
    %1407 = vmatprep.mubr.f32.mxu0 0.0
    %1408 = vmatmul.mubr.f32.gmra.mrb[0].mxu0 %v295
    %v1409 = vpop.f32.mrb[0].mxu0
    %v1410 = vadd.f32 0.0, %v1409
    %v1411 = vpop.f32.mrb[0].mxu0
    %v1412 = vadd.f32 0.0, %v1411
    %1413 = vmatprep.mubr.f32.mxu0 0.0
    %1414 = vmatmul.mubr.f32.gmra.mrb[0].mxu0 %v298
    %v1415 = vpop.f32.mrb[0].mxu0
    %v1416 = vadd.f32 0.0, %v1415
    %v1417 = vpop.f32.mrb[0].mxu0
    %v1418 = vadd.f32 0.0, %v1417
    %1419 = vmatprep.mubr.f32.mxu0 0.0
    %1420 = vmatmul.mubr.f32.gmra.mrb[0].mxu0 %v301
    %v1421 = vpop.f32.mrb[0].mxu0
    %v1422 = vadd.f32 0.0, %v1421
    %v1423 = vpop.f32.mrb[0].mxu0
    %v1424 = vadd.f32 0.0, %v1423
    %1425 = vmatprep.mubr.f32.mxu0 0.0
    %1426 = vmatmul.mubr.f32.gmra.mrb[0].mxu0 %v304
    %v1427 = vpop.f32.mrb[0].mxu0
    %v1428 = vadd.f32 0.0, %v1427
    %v1429 = vpop.f32.mrb[0].mxu0
    %v1430 = vadd.f32 0.0, %v1429
    %1431 = vmatprep.mubr.f32.mxu0 0.0
    %1432 = vmatmul.mubr.f32.gmra.mrb[0].mxu0 %v307
    %v1433 = vpop.f32.mrb[0].mxu0
    %v1434 = vadd.f32 0.0, %v1433
    %v1435 = vpop.f32.mrb[0].mxu0
    %v1436 = vadd.f32 0.0, %v1435
    %1437 = vmatprep.mubr.f32.mxu0 0.0
    %1438 = vmatmul.mubr.f32.gmra.mrb[0].mxu0 %v310
    %v1439 = vpop.f32.mrb[0].mxu0
    %v1440 = vadd.f32 0.0, %v1439
    %v1441 = vpop.f32.mrb[0].mxu0
    %v1442 = vadd.f32 0.0, %v1441
    %1443 = vmatprep.mubr.f32.mxu0 0.0
    %1444 = vmatmul.mubr.f32.gmra.mrb[0].mxu0 %v313
    %v1445 = vpop.f32.mrb[0].mxu0
    %v1446 = vadd.f32 0.0, %v1445
    %v1447 = vpop.f32.mrb[0].mxu0
    %v1448 = vadd.f32 0.0, %v1447
    %1449 = vmatprep.mubr.f32.mxu0 0.0
    %1450 = vmatmul.mubr.f32.gmra.mrb[0].mxu0 %v316
    %v1451 = vpop.f32.mrb[0].mxu0
    %v1452 = vadd.f32 0.0, %v1451
    %v1453 = vpop.f32.mrb[0].mxu0
    %v1454 = vadd.f32 0.0, %v1453
    %1455 = vmatprep.mubr.f32.mxu0 0.0
    %1456 = vmatmul.mubr.f32.gmra.mrb[0].mxu0 %v319
    %v1457 = vpop.f32.mrb[0].mxu0
    %v1458 = vadd.f32 0.0, %v1457
    %v1459 = vpop.f32.mrb[0].mxu0
    %v1460 = vadd.f32 0.0, %v1459
    %1461 = vmatprep.mubr.f32.mxu0 0.0
    %1462 = vmatmul.mubr.f32.gmra.mrb[0].mxu0 %v322
    %v1463 = vpop.f32.mrb[0].mxu0
    %v1464 = vadd.f32 0.0, %v1463
    %v1465 = vpop.f32.mrb[0].mxu0
    %v1466 = vadd.f32 0.0, %v1465
    %1467 = vmatprep.mubr.f32.mxu0 0.0
    %1468 = vmatmul.mubr.f32.gmra.mrb[0].mxu0 %v325
    %v1469 = vpop.f32.mrb[0].mxu0
    %v1470 = vadd.f32 0.0, %v1469
    %v1471 = vpop.f32.mrb[0].mxu0
    %v1472 = vadd.f32 0.0, %v1471
    %1473 = vmatprep.mubr.f32.mxu0 0.0
    %1474 = vmatmul.mubr.f32.gmra.mrb[0].mxu0 %v328
    %v1475 = vpop.f32.mrb[0].mxu0
    %v1476 = vadd.f32 0.0, %v1475
    %v1477 = vpop.f32.mrb[0].mxu0
    %v1478 = vadd.f32 0.0, %v1477
    %1479 = vmatprep.mubr.f32.mxu0 0.0
    %1480 = vmatmul.mubr.f32.gmra.mrb[0].mxu0 %v331
    %v1481 = vpop.f32.mrb[0].mxu0
    %v1482 = vadd.f32 0.0, %v1481
    %v1483 = vpop.f32.mrb[0].mxu0
    %v1484 = vadd.f32 0.0, %v1483
    %1485 = vmatprep.mubr.f32.mxu0 0.0
    %1486 = vmatmul.mubr.f32.gmra.mrb[0].mxu0 %v334
    %v1487 = vpop.f32.mrb[0].mxu0
    %v1488 = vadd.f32 0.0, %v1487
    %v1489 = vpop.f32.mrb[0].mxu0
    %v1490 = vadd.f32 0.0, %v1489
    %1491 = vmatprep.mubr.f32.mxu0 0.0
    %1492 = vmatmul.mubr.f32.gmra.mrb[0].mxu0 %v337
    %v1493 = vpop.f32.mrb[0].mxu0
    %v1494 = vadd.f32 0.0, %v1493
    %v1495 = vpop.f32.mrb[0].mxu0
    %v1496 = vadd.f32 0.0, %v1495
    %1497 = vmatprep.mubr.f32.mxu0 0.0
    %1498 = vmatmul.mubr.f32.gmra.mrb[0].mxu0 %v340
    %v1499 = vpop.f32.mrb[0].mxu0
    %v1500 = vadd.f32 0.0, %v1499
    %v1501 = vpop.f32.mrb[0].mxu0
    %v1502 = vadd.f32 0.0, %v1501
    %1503 = vmatprep.mubr.f32.mxu0 0.0
    %1504 = vmatmul.mubr.f32.gmra.mrb[0].mxu0 %v343
    %v1505 = vpop.f32.mrb[0].mxu0
    %v1506 = vadd.f32 0.0, %v1505
    %v1507 = vpop.f32.mrb[0].mxu0
    %v1508 = vadd.f32 0.0, %v1507
    %1509 = vdwg.mxu0
    %1510 = vmatprep.subr.mxu0 %v225
    %1511 = vmatpush1.msra.mxu0 %v223
    %1512 = vmatprep.subr.mxu0 %v231
    %1513 = vmatpush1.msra.mxu0 %v229
    %1514 = vmatprep.subr.mxu0 0.0
    %1515 = vmatpush1.msra.mxu0 0.0
    %1516 = vmatprep.subr.mxu0 0.0
    %1517 = vmatpush1.msra.mxu0 0.0
    %1518 = vmatprep.subr.mxu0 0.0
    %1519 = vmatpush1.msra.mxu0 0.0
    %1520 = vmatprep.subr.mxu0 0.0
    %1521 = vmatpush1.msra.mxu0 0.0
    %1522 = vmatprep.subr.mxu0 0.0
    %1523 = vmatpush1.msra.mxu0 0.0
    %1524 = vmatprep.subr.mxu0 0.0
    %1525 = vmatpush1.msra.mxu0 0.0
    %1526 = vmatprep.subr.mxu0 0.0
    %1527 = vmatpush1.msra.mxu0 0.0
    %1528 = vmatprep.subr.mxu0 0.0
    %1529 = vmatpush1.msra.mxu0 0.0
    %1530 = vmatprep.subr.mxu0 0.0
    %1531 = vmatpush1.msra.mxu0 0.0
    %1532 = vmatprep.subr.mxu0 0.0
    %1533 = vmatpush1.msra.mxu0 0.0
    %1534 = vmatprep.subr.mxu0 0.0
    %1535 = vmatpush1.msra.mxu0 0.0
    %1536 = vmatprep.subr.mxu0 0.0
    %1537 = vmatpush1.msra.mxu0 0.0
    %1538 = vmatprep.subr.mxu0 0.0
    %1539 = vmatpush1.msra.mxu0 0.0
    %1540 = vmatprep.subr.mxu0 0.0
    %1541 = vmatpush1.msra.mxu0 0.0
    %1542 = vmatprep.subr.mxu0 0.0
    %1543 = vmatpush1.msra.mxu0 0.0
    %1544 = vmatprep.subr.mxu0 0.0
    %1545 = vmatpush1.msra.mxu0 0.0
    %1546 = vmatprep.subr.mxu0 0.0
    %1547 = vmatpush1.msra.mxu0 0.0
    %1548 = vmatprep.subr.mxu0 0.0
    %1549 = vmatpush1.msra.mxu0 0.0
    %1550 = vmatprep.subr.mxu0 0.0
    %1551 = vmatpush1.msra.mxu0 0.0
    %1552 = vmatprep.subr.mxu0 0.0
    %1553 = vmatpush1.msra.mxu0 0.0
    %1554 = vmatprep.subr.mxu0 0.0
    %1555 = vmatpush1.msra.mxu0 0.0
    %1556 = vmatprep.subr.mxu0 0.0
    %1557 = vmatpush1.msra.mxu0 0.0
    %1558 = vmatprep.subr.mxu0 0.0
    %1559 = vmatpush1.msra.mxu0 0.0
    %1560 = vmatprep.subr.mxu0 0.0
    %1561 = vmatpush1.msra.mxu0 0.0
    %1562 = vmatprep.subr.mxu0 0.0
    %1563 = vmatpush1.msra.mxu0 0.0
    %1564 = vmatprep.subr.mxu0 0.0
    %1565 = vmatpush1.msra.mxu0 0.0
    %1566 = vmatprep.subr.mxu0 0.0
    %1567 = vmatpush1.msra.mxu0 0.0
    %1568 = vmatprep.subr.mxu0 0.0
    %1569 = vmatpush1.msra.mxu0 0.0
    %1570 = vmatprep.subr.mxu0 0.0
    %1571 = vmatpush1.msra.mxu0 0.0
    %1572 = vmatprep.subr.mxu0 0.0
    %1573 = vmatpush1.msra.mxu0 0.0
    %1574 = vmatprep.mubr.f32.mxu0 0.0
    %1575 = vmatmul.mubr.f32.gmra.mrb[0].mxu0 %v262
    %v1576 = vpop.f32.mrb[0].mxu0
    %v1577 = vadd.f32 0.0, %v1576
    %v1578 = vpop.f32.mrb[0].mxu0
    %v1579 = vadd.f32 0.0, %v1578
    %1580 = vmatprep.mubr.f32.mxu0 0.0
    %1581 = vmatmul.mubr.f32.gmra.mrb[0].mxu0 %v265
    %v1582 = vpop.f32.mrb[0].mxu0
    %v1583 = vadd.f32 0.0, %v1582
    %v1584 = vpop.f32.mrb[0].mxu0
    %v1585 = vadd.f32 0.0, %v1584
    %1586 = vmatprep.mubr.f32.mxu0 0.0
    %1587 = vmatmul.mubr.f32.gmra.mrb[0].mxu0 %v268
    %v1588 = vpop.f32.mrb[0].mxu0
    %v1589 = vadd.f32 0.0, %v1588
    %v1590 = vpop.f32.mrb[0].mxu0
    %v1591 = vadd.f32 0.0, %v1590
    %1592 = vmatprep.mubr.f32.mxu0 0.0
    %1593 = vmatmul.mubr.f32.gmra.mrb[0].mxu0 %v271
    %v1594 = vpop.f32.mrb[0].mxu0
    %v1595 = vadd.f32 0.0, %v1594
    %v1596 = vpop.f32.mrb[0].mxu0
    %v1597 = vadd.f32 0.0, %v1596
    %1598 = vmatprep.mubr.f32.mxu0 0.0
    %1599 = vmatmul.mubr.f32.gmra.mrb[0].mxu0 %v274
    %v1600 = vpop.f32.mrb[0].mxu0
    %v1601 = vadd.f32 0.0, %v1600
    %v1602 = vpop.f32.mrb[0].mxu0
    %v1603 = vadd.f32 0.0, %v1602
    %1604 = vmatprep.mubr.f32.mxu0 0.0
    %1605 = vmatmul.mubr.f32.gmra.mrb[0].mxu0 %v277
    %v1606 = vpop.f32.mrb[0].mxu0
    %v1607 = vadd.f32 0.0, %v1606
    %v1608 = vpop.f32.mrb[0].mxu0
    %v1609 = vadd.f32 0.0, %v1608
    %1610 = vmatprep.mubr.f32.mxu0 0.0
    %1611 = vmatmul.mubr.f32.gmra.mrb[0].mxu0 %v280
    %v1612 = vpop.f32.mrb[0].mxu0
    %v1613 = vadd.f32 0.0, %v1612
    %v1614 = vpop.f32.mrb[0].mxu0
    %v1615 = vadd.f32 0.0, %v1614
    %1616 = vmatprep.mubr.f32.mxu0 0.0
    %1617 = vmatmul.mubr.f32.gmra.mrb[0].mxu0 %v283
    %v1618 = vpop.f32.mrb[0].mxu0
    %v1619 = vadd.f32 0.0, %v1618
    %v1620 = vpop.f32.mrb[0].mxu0
    %v1621 = vadd.f32 0.0, %v1620
    %1622 = vmatprep.mubr.f32.mxu0 0.0
    %1623 = vmatmul.mubr.f32.gmra.mrb[0].mxu0 %v286
    %v1624 = vpop.f32.mrb[0].mxu0
    %v1625 = vadd.f32 0.0, %v1624
    %v1626 = vpop.f32.mrb[0].mxu0
    %v1627 = vadd.f32 0.0, %v1626
    %1628 = vmatprep.mubr.f32.mxu0 0.0
    %1629 = vmatmul.mubr.f32.gmra.mrb[0].mxu0 %v289
    %v1630 = vpop.f32.mrb[0].mxu0
    %v1631 = vadd.f32 0.0, %v1630
    %v1632 = vpop.f32.mrb[0].mxu0
    %v1633 = vadd.f32 0.0, %v1632
    %1634 = vmatprep.mubr.f32.mxu0 0.0
    %1635 = vmatmul.mubr.f32.gmra.mrb[0].mxu0 %v292
    %v1636 = vpop.f32.mrb[0].mxu0
    %v1637 = vadd.f32 0.0, %v1636
    %v1638 = vpop.f32.mrb[0].mxu0
    %v1639 = vadd.f32 0.0, %v1638
    %1640 = vmatprep.mubr.f32.mxu0 0.0
    %1641 = vmatmul.mubr.f32.gmra.mrb[0].mxu0 %v295
    %v1642 = vpop.f32.mrb[0].mxu0
    %v1643 = vadd.f32 0.0, %v1642
    %v1644 = vpop.f32.mrb[0].mxu0
    %v1645 = vadd.f32 0.0, %v1644
    %1646 = vmatprep.mubr.f32.mxu0 0.0
    %1647 = vmatmul.mubr.f32.gmra.mrb[0].mxu0 %v298
    %v1648 = vpop.f32.mrb[0].mxu0
    %v1649 = vadd.f32 0.0, %v1648
    %v1650 = vpop.f32.mrb[0].mxu0
    %v1651 = vadd.f32 0.0, %v1650
    %1652 = vmatprep.mubr.f32.mxu0 0.0
    %1653 = vmatmul.mubr.f32.gmra.mrb[0].mxu0 %v301
    %v1654 = vpop.f32.mrb[0].mxu0
    %v1655 = vadd.f32 0.0, %v1654
    %v1656 = vpop.f32.mrb[0].mxu0
    %v1657 = vadd.f32 0.0, %v1656
    %1658 = vmatprep.mubr.f32.mxu0 0.0
    %1659 = vmatmul.mubr.f32.gmra.mrb[0].mxu0 %v304
    %v1660 = vpop.f32.mrb[0].mxu0
    %v1661 = vadd.f32 0.0, %v1660
    %v1662 = vpop.f32.mrb[0].mxu0
    %v1663 = vadd.f32 0.0, %v1662
    %1664 = vmatprep.mubr.f32.mxu0 0.0
    %1665 = vmatmul.mubr.f32.gmra.mrb[0].mxu0 %v307
    %v1666 = vpop.f32.mrb[0].mxu0
    %v1667 = vadd.f32 0.0, %v1666
    %v1668 = vpop.f32.mrb[0].mxu0
    %v1669 = vadd.f32 0.0, %v1668
    %1670 = vmatprep.mubr.f32.mxu0 0.0
    %1671 = vmatmul.mubr.f32.gmra.mrb[0].mxu0 %v310
    %v1672 = vpop.f32.mrb[0].mxu0
    %v1673 = vadd.f32 0.0, %v1672
    %v1674 = vpop.f32.mrb[0].mxu0
    %v1675 = vadd.f32 0.0, %v1674
    %1676 = vmatprep.mubr.f32.mxu0 0.0
    %1677 = vmatmul.mubr.f32.gmra.mrb[0].mxu0 %v313
    %v1678 = vpop.f32.mrb[0].mxu0
    %v1679 = vadd.f32 0.0, %v1678
    %v1680 = vpop.f32.mrb[0].mxu0
    %v1681 = vadd.f32 0.0, %v1680
    %1682 = vmatprep.mubr.f32.mxu0 0.0
    %1683 = vmatmul.mubr.f32.gmra.mrb[0].mxu0 %v316
    %v1684 = vpop.f32.mrb[0].mxu0
    %v1685 = vadd.f32 0.0, %v1684
    %v1686 = vpop.f32.mrb[0].mxu0
    %v1687 = vadd.f32 0.0, %v1686
    %1688 = vmatprep.mubr.f32.mxu0 0.0
    %1689 = vmatmul.mubr.f32.gmra.mrb[0].mxu0 %v319
    %v1690 = vpop.f32.mrb[0].mxu0
    %v1691 = vadd.f32 0.0, %v1690
    %v1692 = vpop.f32.mrb[0].mxu0
    %v1693 = vadd.f32 0.0, %v1692
    %1694 = vmatprep.mubr.f32.mxu0 0.0
    %1695 = vmatmul.mubr.f32.gmra.mrb[0].mxu0 %v322
    %v1696 = vpop.f32.mrb[0].mxu0
    %v1697 = vadd.f32 0.0, %v1696
    %v1698 = vpop.f32.mrb[0].mxu0
    %v1699 = vadd.f32 0.0, %v1698
    %1700 = vmatprep.mubr.f32.mxu0 0.0
    %1701 = vmatmul.mubr.f32.gmra.mrb[0].mxu0 %v325
    %v1702 = vpop.f32.mrb[0].mxu0
    %v1703 = vadd.f32 0.0, %v1702
    %v1704 = vpop.f32.mrb[0].mxu0
    %v1705 = vadd.f32 0.0, %v1704
    %1706 = vmatprep.mubr.f32.mxu0 0.0
    %1707 = vmatmul.mubr.f32.gmra.mrb[0].mxu0 %v328
    %v1708 = vpop.f32.mrb[0].mxu0
    %v1709 = vadd.f32 0.0, %v1708
    %v1710 = vpop.f32.mrb[0].mxu0
    %v1711 = vadd.f32 0.0, %v1710
    %1712 = vmatprep.mubr.f32.mxu0 0.0
    %1713 = vmatmul.mubr.f32.gmra.mrb[0].mxu0 %v331
    %v1714 = vpop.f32.mrb[0].mxu0
    %v1715 = vadd.f32 0.0, %v1714
    %v1716 = vpop.f32.mrb[0].mxu0
    %v1717 = vadd.f32 0.0, %v1716
    %1718 = vmatprep.mubr.f32.mxu0 0.0
    %1719 = vmatmul.mubr.f32.gmra.mrb[0].mxu0 %v334
    %v1720 = vpop.f32.mrb[0].mxu0
    %v1721 = vadd.f32 0.0, %v1720
    %v1722 = vpop.f32.mrb[0].mxu0
    %v1723 = vadd.f32 0.0, %v1722
    %1724 = vmatprep.mubr.f32.mxu0 0.0
    %1725 = vmatmul.mubr.f32.gmra.mrb[0].mxu0 %v337
    %v1726 = vpop.f32.mrb[0].mxu0
    %v1727 = vadd.f32 0.0, %v1726
    %v1728 = vpop.f32.mrb[0].mxu0
    %v1729 = vadd.f32 0.0, %v1728
    %1730 = vmatprep.mubr.f32.mxu0 0.0
    %1731 = vmatmul.mubr.f32.gmra.mrb[0].mxu0 %v340
    %v1732 = vpop.f32.mrb[0].mxu0
    %v1733 = vadd.f32 0.0, %v1732
    %v1734 = vpop.f32.mrb[0].mxu0
    %v1735 = vadd.f32 0.0, %v1734
    %1736 = vmatprep.mubr.f32.mxu0 0.0
    %1737 = vmatmul.mubr.f32.gmra.mrb[0].mxu0 %v343
    %v1738 = vpop.f32.mrb[0].mxu0
    %v1739 = vadd.f32 0.0, %v1738
    %v1740 = vpop.f32.mrb[0].mxu0
    %v1741 = vadd.f32 0.0, %v1740
    %1742 = vdwg.mxu0
    %v1743 = vsub.f32 %v412, 1.0
    %v1744 = vsub.f32 %v414, 1.0
    %v1745 = vsub.f32 %v418, 1.0
    %v1746 = vsub.f32 %v420, 1.0
    %v1747 = vsub.f32 %v424, 1.0
    %v1748 = vsub.f32 %v426, 1.0
    %v1749 = vsub.f32 %v430, 1.0
    %v1750 = vsub.f32 %v432, 1.0
    %v1751 = vsub.f32 %v436, 1.0
    %v1752 = vsub.f32 %v438, 1.0
    %v1753 = vsub.f32 %v442, 1.0
    %v1754 = vsub.f32 %v444, 1.0
    %v1755 = vsub.f32 %v448, 1.0
    %v1756 = vsub.f32 %v450, 1.0
    %v1757 = vsub.f32 %v454, 1.0
    %v1758 = vsub.f32 %v456, 1.0
    %v1759 = vsub.f32 %v460, 1.0
    %v1760 = vsub.f32 %v462, 1.0
    %v1761 = vsub.f32 %v466, 1.0
    %v1762 = vsub.f32 %v468, 1.0
    %v1763 = vsub.f32 %v472, 1.0
    %v1764 = vsub.f32 %v474, 1.0
    %v1765 = vsub.f32 %v478, 1.0
    %v1766 = vsub.f32 %v480, 1.0
    %v1767 = vsub.f32 %v484, 1.0
    %v1768 = vsub.f32 %v486, 1.0
    %v1769 = vsub.f32 %v490, 1.0
    %v1770 = vsub.f32 %v492, 1.0
    %v1771 = vsub.f32 %v496, 1.0
    %v1772 = vsub.f32 %v498, 1.0
    %v1773 = vsub.f32 %v502, 1.0
    %v1774 = vsub.f32 %v504, 1.0
    %v1775 = vsub.f32 %v508, 1.0
    %v1776 = vsub.f32 %v510, 1.0
    %v1777 = vsub.f32 %v514, 1.0
    %v1778 = vsub.f32 %v516, 1.0
    %v1779 = vsub.f32 %v520, 1.0
    %v1780 = vsub.f32 %v522, 1.0
    %v1781 = vsub.f32 %v526, 1.0
    %v1782 = vsub.f32 %v528, 1.0
    %v1783 = vsub.f32 %v532, 1.0
    %v1784 = vsub.f32 %v534, 1.0
    %v1785 = vsub.f32 %v538, 1.0
    %v1786 = vsub.f32 %v540, 1.0
    %v1787 = vsub.f32 %v544, 1.0
    %v1788 = vsub.f32 %v546, 1.0
    %v1789 = vsub.f32 %v550, 1.0
    %v1790 = vsub.f32 %v552, 1.0
    %v1791 = vsub.f32 %v556, 1.0
    %v1792 = vsub.f32 %v558, 1.0
    %v1793 = vsub.f32 %v562, 1.0
    %v1794 = vsub.f32 %v564, 1.0
    %v1795 = vsub.f32 %v568, 1.0
    %v1796 = vsub.f32 %v570, 1.0
    %v1797 = vsub.f32 %v574, 1.0
    %v1798 = vsub.f32 %v576, 1.0
    %v1799 = vsub.f32 %v645, 1.0
    %v1800 = vsub.f32 %v647, 1.0
    %v1801 = vsub.f32 %v651, 1.0
    %v1802 = vsub.f32 %v653, 1.0
    %v1803 = vsub.f32 %v657, 1.0
    %v1804 = vsub.f32 %v659, 1.0
    %v1805 = vsub.f32 %v663, 1.0
    %v1806 = vsub.f32 %v665, 1.0
    %v1807 = vsub.f32 %v669, 1.0
    %v1808 = vsub.f32 %v671, 1.0
    %v1809 = vsub.f32 %v675, 1.0
    %v1810 = vsub.f32 %v677, 1.0
    %v1811 = vsub.f32 %v681, 1.0
    %v1812 = vsub.f32 %v683, 1.0
    %v1813 = vsub.f32 %v687, 1.0
    %v1814 = vsub.f32 %v689, 1.0
    %v1815 = vsub.f32 %v693, 1.0
    %v1816 = vsub.f32 %v695, 1.0
    %v1817 = vsub.f32 %v699, 1.0
    %v1818 = vsub.f32 %v701, 1.0
    %v1819 = vsub.f32 %v705, 1.0
    %v1820 = vsub.f32 %v707, 1.0
    %v1821 = vsub.f32 %v711, 1.0
    %v1822 = vsub.f32 %v713, 1.0
    %v1823 = vsub.f32 %v717, 1.0
    %v1824 = vsub.f32 %v719, 1.0
    %v1825 = vsub.f32 %v723, 1.0
    %v1826 = vsub.f32 %v725, 1.0
    %v1827 = vsub.f32 %v729, 1.0
    %v1828 = vsub.f32 %v731, 1.0
    %v1829 = vsub.f32 %v735, 1.0
    %v1830 = vsub.f32 %v737, 1.0
    %v1831 = vsub.f32 %v741, 1.0
    %v1832 = vsub.f32 %v743, 1.0
    %v1833 = vsub.f32 %v747, 1.0
    %v1834 = vsub.f32 %v749, 1.0
    %v1835 = vsub.f32 %v753, 1.0
    %v1836 = vsub.f32 %v755, 1.0
    %v1837 = vsub.f32 %v759, 1.0
    %v1838 = vsub.f32 %v761, 1.0
    %v1839 = vsub.f32 %v765, 1.0
    %v1840 = vsub.f32 %v767, 1.0
    %v1841 = vsub.f32 %v771, 1.0
    %v1842 = vsub.f32 %v773, 1.0
    %v1843 = vsub.f32 %v777, 1.0
    %v1844 = vsub.f32 %v779, 1.0
    %v1845 = vsub.f32 %v783, 1.0
    %v1846 = vsub.f32 %v785, 1.0
    %v1847 = vsub.f32 %v789, 1.0
    %v1848 = vsub.f32 %v791, 1.0
    %v1849 = vsub.f32 %v795, 1.0
    %v1850 = vsub.f32 %v797, 1.0
    %v1851 = vsub.f32 %v801, 1.0
    %v1852 = vsub.f32 %v803, 1.0
    %v1853 = vsub.f32 %v807, 1.0
    %v1854 = vsub.f32 %v809, 1.0
    %v1855 = vsub.f32 %v878, 1.0
    %v1856 = vsub.f32 %v880, 1.0
    %v1857 = vsub.f32 %v884, 1.0
    %v1858 = vsub.f32 %v886, 1.0
    %v1859 = vsub.f32 %v890, 1.0
    %v1860 = vsub.f32 %v892, 1.0
    %v1861 = vsub.f32 %v896, 1.0
    %v1862 = vsub.f32 %v898, 1.0
    %v1863 = vsub.f32 %v902, 1.0
    %v1864 = vsub.f32 %v904, 1.0
    %v1865 = vsub.f32 %v908, 1.0
    %v1866 = vsub.f32 %v910, 1.0
    %v1867 = vsub.f32 %v914, 1.0
    %v1868 = vsub.f32 %v916, 1.0
    %v1869 = vsub.f32 %v920, 1.0
    %v1870 = vsub.f32 %v922, 1.0
    %v1871 = vsub.f32 %v926, 1.0
    %v1872 = vsub.f32 %v928, 1.0
    %v1873 = vsub.f32 %v932, 1.0
    %v1874 = vsub.f32 %v934, 1.0
    %v1875 = vsub.f32 %v938, 1.0
    %v1876 = vsub.f32 %v940, 1.0
    %v1877 = vsub.f32 %v944, 1.0
    %v1878 = vsub.f32 %v946, 1.0
    %v1879 = vsub.f32 %v950, 1.0
    %v1880 = vsub.f32 %v952, 1.0
    %v1881 = vsub.f32 %v956, 1.0
    %v1882 = vsub.f32 %v958, 1.0
    %v1883 = vsub.f32 %v962, 1.0
    %v1884 = vsub.f32 %v964, 1.0
    %v1885 = vsub.f32 %v968, 1.0
    %v1886 = vsub.f32 %v970, 1.0
    %v1887 = vsub.f32 %v974, 1.0
    %v1888 = vsub.f32 %v976, 1.0
    %v1889 = vsub.f32 %v980, 1.0
    %v1890 = vsub.f32 %v982, 1.0
    %v1891 = vsub.f32 %v986, 1.0
    %v1892 = vsub.f32 %v988, 1.0
    %v1893 = vsub.f32 %v992, 1.0
    %v1894 = vsub.f32 %v994, 1.0
    %v1895 = vsub.f32 %v998, 1.0
    %v1896 = vsub.f32 %v1000, 1.0
    %v1897 = vsub.f32 %v1004, 1.0
    %v1898 = vsub.f32 %v1006, 1.0
    %v1899 = vsub.f32 %v1010, 1.0
    %v1900 = vsub.f32 %v1012, 1.0
    %v1901 = vsub.f32 %v1016, 1.0
    %v1902 = vsub.f32 %v1018, 1.0
    %v1903 = vsub.f32 %v1022, 1.0
    %v1904 = vsub.f32 %v1024, 1.0
    %v1905 = vsub.f32 %v1028, 1.0
    %v1906 = vsub.f32 %v1030, 1.0
    %v1907 = vsub.f32 %v1034, 1.0
    %v1908 = vsub.f32 %v1036, 1.0
    %v1909 = vsub.f32 %v1040, 1.0
    %v1910 = vsub.f32 %v1042, 1.0
    %v1911 = vsub.f32 %v1111, 1.0
    %v1912 = vsub.f32 %v1113, 1.0
    %v1913 = vsub.f32 %v1117, 1.0
    %v1914 = vsub.f32 %v1119, 1.0
    %v1915 = vsub.f32 %v1123, 1.0
    %v1916 = vsub.f32 %v1125, 1.0
    %v1917 = vsub.f32 %v1129, 1.0
    %v1918 = vsub.f32 %v1131, 1.0
    %v1919 = vsub.f32 %v1135, 1.0
    %v1920 = vsub.f32 %v1137, 1.0
    %v1921 = vsub.f32 %v1141, 1.0
    %v1922 = vsub.f32 %v1143, 1.0
    %v1923 = vsub.f32 %v1147, 1.0
    %v1924 = vsub.f32 %v1149, 1.0
    %v1925 = vsub.f32 %v1153, 1.0
    %v1926 = vsub.f32 %v1155, 1.0
    %v1927 = vsub.f32 %v1159, 1.0
    %v1928 = vsub.f32 %v1161, 1.0
    %v1929 = vsub.f32 %v1165, 1.0
    %v1930 = vsub.f32 %v1167, 1.0
    %v1931 = vsub.f32 %v1171, 1.0
    %v1932 = vsub.f32 %v1173, 1.0
    %v1933 = vsub.f32 %v1177, 1.0
    %v1934 = vsub.f32 %v1179, 1.0
    %v1935 = vsub.f32 %v1183, 1.0
    %v1936 = vsub.f32 %v1185, 1.0
    %v1937 = vsub.f32 %v1189, 1.0
    %v1938 = vsub.f32 %v1191, 1.0
    %v1939 = vsub.f32 %v1195, 1.0
    %v1940 = vsub.f32 %v1197, 1.0
    %v1941 = vsub.f32 %v1201, 1.0
    %v1942 = vsub.f32 %v1203, 1.0
    %v1943 = vsub.f32 %v1207, 1.0
    %v1944 = vsub.f32 %v1209, 1.0
    %v1945 = vsub.f32 %v1213, 1.0
    %v1946 = vsub.f32 %v1215, 1.0
    %v1947 = vsub.f32 %v1219, 1.0
    %v1948 = vsub.f32 %v1221, 1.0
    %v1949 = vsub.f32 %v1225, 1.0
    %v1950 = vsub.f32 %v1227, 1.0
    %v1951 = vsub.f32 %v1231, 1.0
    %v1952 = vsub.f32 %v1233, 1.0
    %v1953 = vsub.f32 %v1237, 1.0
    %v1954 = vsub.f32 %v1239, 1.0
    %v1955 = vsub.f32 %v1243, 1.0
    %v1956 = vsub.f32 %v1245, 1.0
    %v1957 = vsub.f32 %v1249, 1.0
    %v1958 = vsub.f32 %v1251, 1.0
    %v1959 = vsub.f32 %v1255, 1.0
    %v1960 = vsub.f32 %v1257, 1.0
    %v1961 = vsub.f32 %v1261, 1.0
    %v1962 = vsub.f32 %v1263, 1.0
    %v1963 = vsub.f32 %v1267, 1.0
    %v1964 = vsub.f32 %v1269, 1.0
    %v1965 = vsub.f32 %v1273, 1.0
    %v1966 = vsub.f32 %v1275, 1.0
    %v1967 = vsub.f32 %v1344, 1.0
    %v1968 = vsub.f32 %v1346, 1.0
    %v1969 = vsub.f32 %v1350, 1.0
    %v1970 = vsub.f32 %v1352, 1.0
    %v1971 = vsub.f32 %v1356, 1.0
    %v1972 = vsub.f32 %v1358, 1.0
    %v1973 = vsub.f32 %v1362, 1.0
    %v1974 = vsub.f32 %v1364, 1.0
    %v1975 = vsub.f32 %v1368, 1.0
    %v1976 = vsub.f32 %v1370, 1.0
    %v1977 = vsub.f32 %v1374, 1.0
    %v1978 = vsub.f32 %v1376, 1.0
    %v1979 = vsub.f32 %v1380, 1.0
    %v1980 = vsub.f32 %v1382, 1.0
    %v1981 = vsub.f32 %v1386, 1.0
    %v1982 = vsub.f32 %v1388, 1.0
    %v1983 = vsub.f32 %v1392, 1.0
    %v1984 = vsub.f32 %v1394, 1.0
    %v1985 = vsub.f32 %v1398, 1.0
    %v1986 = vsub.f32 %v1400, 1.0
    %v1987 = vsub.f32 %v1404, 1.0
    %v1988 = vsub.f32 %v1406, 1.0
    %v1989 = vsub.f32 %v1410, 1.0
    %v1990 = vsub.f32 %v1412, 1.0
    %v1991 = vsub.f32 %v1416, 1.0
    %v1992 = vsub.f32 %v1418, 1.0
    %v1993 = vsub.f32 %v1422, 1.0
    %v1994 = vsub.f32 %v1424, 1.0
    %v1995 = vsub.f32 %v1428, 1.0
    %v1996 = vsub.f32 %v1430, 1.0
    %v1997 = vsub.f32 %v1434, 1.0
    %v1998 = vsub.f32 %v1436, 1.0
    %v1999 = vsub.f32 %v1440, 1.0
    %v2000 = vsub.f32 %v1442, 1.0
    %v2001 = vsub.f32 %v1446, 1.0
    %v2002 = vsub.f32 %v1448, 1.0
    %v2003 = vsub.f32 %v1452, 1.0
    %v2004 = vsub.f32 %v1454, 1.0
    %v2005 = vsub.f32 %v1458, 1.0
    %v2006 = vsub.f32 %v1460, 1.0
    %v2007 = vsub.f32 %v1464, 1.0
    %v2008 = vsub.f32 %v1466, 1.0
    %v2009 = vsub.f32 %v1470, 1.0
    %v2010 = vsub.f32 %v1472, 1.0
    %v2011 = vsub.f32 %v1476, 1.0
    %v2012 = vsub.f32 %v1478, 1.0
    %v2013 = vsub.f32 %v1482, 1.0
    %v2014 = vsub.f32 %v1484, 1.0
    %v2015 = vsub.f32 %v1488, 1.0
    %v2016 = vsub.f32 %v1490, 1.0
    %v2017 = vsub.f32 %v1494, 1.0
    %v2018 = vsub.f32 %v1496, 1.0
    %v2019 = vsub.f32 %v1500, 1.0
    %v2020 = vsub.f32 %v1502, 1.0
    %v2021 = vsub.f32 %v1506, 1.0
    %v2022 = vsub.f32 %v1508, 1.0
    %v2023 = vsub.f32 %v1577, 1.0
    %v2024 = vsub.f32 %v1579, 1.0
    %v2025 = vsub.f32 %v1583, 1.0
    %v2026 = vsub.f32 %v1585, 1.0
    %v2027 = vsub.f32 %v1589, 1.0
    %v2028 = vsub.f32 %v1591, 1.0
    %v2029 = vsub.f32 %v1595, 1.0
    %v2030 = vsub.f32 %v1597, 1.0
    %v2031 = vsub.f32 %v1601, 1.0
    %v2032 = vsub.f32 %v1603, 1.0
    %v2033 = vsub.f32 %v1607, 1.0
    %v2034 = vsub.f32 %v1609, 1.0
    %v2035 = vsub.f32 %v1613, 1.0
    %v2036 = vsub.f32 %v1615, 1.0
    %v2037 = vsub.f32 %v1619, 1.0
    %v2038 = vsub.f32 %v1621, 1.0
    %v2039 = vsub.f32 %v1625, 1.0
    %v2040 = vsub.f32 %v1627, 1.0
    %v2041 = vsub.f32 %v1631, 1.0
    %v2042 = vsub.f32 %v1633, 1.0
    %v2043 = vsub.f32 %v1637, 1.0
    %v2044 = vsub.f32 %v1639, 1.0
    %v2045 = vsub.f32 %v1643, 1.0
    %v2046 = vsub.f32 %v1645, 1.0
    %v2047 = vsub.f32 %v1649, 1.0
    %v2048 = vsub.f32 %v1651, 1.0
    %v2049 = vsub.f32 %v1655, 1.0
    %v2050 = vsub.f32 %v1657, 1.0
    %v2051 = vsub.f32 %v1661, 1.0
    %v2052 = vsub.f32 %v1663, 1.0
    %v2053 = vsub.f32 %v1667, 1.0
    %v2054 = vsub.f32 %v1669, 1.0
    %v2055 = vsub.f32 %v1673, 1.0
    %v2056 = vsub.f32 %v1675, 1.0
    %v2057 = vsub.f32 %v1679, 1.0
    %v2058 = vsub.f32 %v1681, 1.0
    %v2059 = vsub.f32 %v1685, 1.0
    %v2060 = vsub.f32 %v1687, 1.0
    %v2061 = vsub.f32 %v1691, 1.0
    %v2062 = vsub.f32 %v1693, 1.0
    %v2063 = vsub.f32 %v1697, 1.0
    %v2064 = vsub.f32 %v1699, 1.0
    %v2065 = vsub.f32 %v1703, 1.0
    %v2066 = vsub.f32 %v1705, 1.0
    %v2067 = vsub.f32 %v1709, 1.0
    %v2068 = vsub.f32 %v1711, 1.0
    %v2069 = vsub.f32 %v1715, 1.0
    %v2070 = vsub.f32 %v1717, 1.0
    %v2071 = vsub.f32 %v1721, 1.0
    %v2072 = vsub.f32 %v1723, 1.0
    %v2073 = vsub.f32 %v1727, 1.0
    %v2074 = vsub.f32 %v1729, 1.0
    %v2075 = vsub.f32 %v1733, 1.0
    %v2076 = vsub.f32 %v1735, 1.0
    %v2077 = vsub.f32 %v1739, 1.0
    %v2078 = vsub.f32 %v1741, 1.0
    %2079 = vst [vmem:[#allocation7] sm:$0xff] %v1743
    %vm2080 = vcmask 785408
    %2081 = vst.msk [vmem:[#allocation7 + $0x8] sm:$0xff] %vm2080, %v1744
    %2082 = vst [vmem:[#allocation7 + $0x10] sm:$0xff] %v1745
    %2083 = vst.msk [vmem:[#allocation7 + $0x18] sm:$0xff] %vm2080, %v1746
    %2084 = vst [vmem:[#allocation7 + $0x20] sm:$0xff] %v1747
    %2085 = vst.msk [vmem:[#allocation7 + $0x28] sm:$0xff] %vm2080, %v1748
    %2086 = vst [vmem:[#allocation7 + $0x30] sm:$0xff] %v1749
    %2087 = vst.msk [vmem:[#allocation7 + $0x38] sm:$0xff] %vm2080, %v1750
    %2088 = vst [vmem:[#allocation7 + $0x40] sm:$0xff] %v1751
    %2089 = vst.msk [vmem:[#allocation7 + $0x48] sm:$0xff] %vm2080, %v1752
    %2090 = vst [vmem:[#allocation7 + $0x50] sm:$0xff] %v1753
    %2091 = vst.msk [vmem:[#allocation7 + $0x58] sm:$0xff] %vm2080, %v1754
    %2092 = vst [vmem:[#allocation7 + $0x60] sm:$0xff] %v1755
    %2093 = vst.msk [vmem:[#allocation7 + $0x68] sm:$0xff] %vm2080, %v1756
    %2094 = vst [vmem:[#allocation7 + $0x70] sm:$0xff] %v1757
    %2095 = vst.msk [vmem:[#allocation7 + $0x78] sm:$0xff] %vm2080, %v1758
    %2096 = vst [vmem:[#allocation7 + $0x80] sm:$0xff] %v1759
    %2097 = vst.msk [vmem:[#allocation7 + $0x88] sm:$0xff] %vm2080, %v1760
    %2098 = vst [vmem:[#allocation7 + $0x90] sm:$0xff] %v1761
    %2099 = vst.msk [vmem:[#allocation7 + $0x98] sm:$0xff] %vm2080, %v1762
    %2100 = vst [vmem:[#allocation7 + $0xa0] sm:$0xff] %v1763
    %2101 = vst.msk [vmem:[#allocation7 + $0xa8] sm:$0xff] %vm2080, %v1764
    %2102 = vst [vmem:[#allocation7 + $0xb0] sm:$0xff] %v1765
    %2103 = vst.msk [vmem:[#allocation7 + $0xb8] sm:$0xff] %vm2080, %v1766
    %2104 = vst [vmem:[#allocation7 + $0xc0] sm:$0xff] %v1767
    %2105 = vst.msk [vmem:[#allocation7 + $0xc8] sm:$0xff] %vm2080, %v1768
    %2106 = vst [vmem:[#allocation7 + $0xd0] sm:$0xff] %v1769
    %2107 = vst.msk [vmem:[#allocation7 + $0xd8] sm:$0xff] %vm2080, %v1770
    %2108 = vst [vmem:[#allocation7 + $0xe0] sm:$0xff] %v1771
    %2109 = vst.msk [vmem:[#allocation7 + $0xe8] sm:$0xff] %vm2080, %v1772
    %2110 = vst [vmem:[#allocation7 + $0xf0] sm:$0xff] %v1773
    %2111 = vst.msk [vmem:[#allocation7 + $0xf8] sm:$0xff] %vm2080, %v1774
    %2112 = vst [vmem:[#allocation7 + $0x100] sm:$0xff] %v1775
    %2113 = vst.msk [vmem:[#allocation7 + $0x108] sm:$0xff] %vm2080, %v1776
    %2114 = vst [vmem:[#allocation7 + $0x110] sm:$0xff] %v1777
    %2115 = vst.msk [vmem:[#allocation7 + $0x118] sm:$0xff] %vm2080, %v1778
    %2116 = vst [vmem:[#allocation7 + $0x120] sm:$0xff] %v1779
    %2117 = vst.msk [vmem:[#allocation7 + $0x128] sm:$0xff] %vm2080, %v1780
    %2118 = vst [vmem:[#allocation7 + $0x130] sm:$0xff] %v1781
    %2119 = vst.msk [vmem:[#allocation7 + $0x138] sm:$0xff] %vm2080, %v1782
    %2120 = vst [vmem:[#allocation7 + $0x140] sm:$0xff] %v1783
    %2121 = vst.msk [vmem:[#allocation7 + $0x148] sm:$0xff] %vm2080, %v1784
    %2122 = vst [vmem:[#allocation7 + $0x150] sm:$0xff] %v1785
    %2123 = vst.msk [vmem:[#allocation7 + $0x158] sm:$0xff] %vm2080, %v1786
    %2124 = vst [vmem:[#allocation7 + $0x160] sm:$0xff] %v1787
    %2125 = vst.msk [vmem:[#allocation7 + $0x168] sm:$0xff] %vm2080, %v1788
    %2126 = vst [vmem:[#allocation7 + $0x170] sm:$0xff] %v1789
    %2127 = vst.msk [vmem:[#allocation7 + $0x178] sm:$0xff] %vm2080, %v1790
    %2128 = vst [vmem:[#allocation7 + $0x180] sm:$0xff] %v1791
    %2129 = vst.msk [vmem:[#allocation7 + $0x188] sm:$0xff] %vm2080, %v1792
    %2130 = vst [vmem:[#allocation7 + $0x190] sm:$0xff] %v1793
    %2131 = vst.msk [vmem:[#allocation7 + $0x198] sm:$0xff] %vm2080, %v1794
    %2132 = vst [vmem:[#allocation7 + $0x1a0] sm:$0xff] %v1795
    %2133 = vst.msk [vmem:[#allocation7 + $0x1a8] sm:$0xff] %vm2080, %v1796
    %2134 = vst [vmem:[#allocation7 + $0x1b0] sm:$0xff] %v1797
    %2135 = vst.msk [vmem:[#allocation7 + $0x1b8] sm:$0xff] %vm2080, %v1798
    %2136 = vst [vmem:[#allocation7 + $0x1c0] sm:$0xff] %v1799
    %2137 = vst.msk [vmem:[#allocation7 + $0x1c8] sm:$0xff] %vm2080, %v1800
    %2138 = vst [vmem:[#allocation7 + $0x1d0] sm:$0xff] %v1801
    %2139 = vst.msk [vmem:[#allocation7 + $0x1d8] sm:$0xff] %vm2080, %v1802
    %2140 = vst [vmem:[#allocation7 + $0x1e0] sm:$0xff] %v1803
    %2141 = vst.msk [vmem:[#allocation7 + $0x1e8] sm:$0xff] %vm2080, %v1804
    %2142 = vst [vmem:[#allocation7 + $0x1f0] sm:$0xff] %v1805
    %2143 = vst.msk [vmem:[#allocation7 + $0x1f8] sm:$0xff] %vm2080, %v1806
    %2144 = vst [vmem:[#allocation7 + $0x200] sm:$0xff] %v1807
    %2145 = vst.msk [vmem:[#allocation7 + $0x208] sm:$0xff] %vm2080, %v1808
    %2146 = vst [vmem:[#allocation7 + $0x210] sm:$0xff] %v1809
    %2147 = vst.msk [vmem:[#allocation7 + $0x218] sm:$0xff] %vm2080, %v1810
    %2148 = vst [vmem:[#allocation7 + $0x220] sm:$0xff] %v1811
    %2149 = vst.msk [vmem:[#allocation7 + $0x228] sm:$0xff] %vm2080, %v1812
    %2150 = vst [vmem:[#allocation7 + $0x230] sm:$0xff] %v1813
    %2151 = vst.msk [vmem:[#allocation7 + $0x238] sm:$0xff] %vm2080, %v1814
    %2152 = vst [vmem:[#allocation7 + $0x240] sm:$0xff] %v1815
    %2153 = vst.msk [vmem:[#allocation7 + $0x248] sm:$0xff] %vm2080, %v1816
    %2154 = vst [vmem:[#allocation7 + $0x250] sm:$0xff] %v1817
    %2155 = vst.msk [vmem:[#allocation7 + $0x258] sm:$0xff] %vm2080, %v1818
    %2156 = vst [vmem:[#allocation7 + $0x260] sm:$0xff] %v1819
    %2157 = vst.msk [vmem:[#allocation7 + $0x268] sm:$0xff] %vm2080, %v1820
    %2158 = vst [vmem:[#allocation7 + $0x270] sm:$0xff] %v1821
    %2159 = vst.msk [vmem:[#allocation7 + $0x278] sm:$0xff] %vm2080, %v1822
    %2160 = vst [vmem:[#allocation7 + $0x280] sm:$0xff] %v1823
    %2161 = vst.msk [vmem:[#allocation7 + $0x288] sm:$0xff] %vm2080, %v1824
    %2162 = vst [vmem:[#allocation7 + $0x290] sm:$0xff] %v1825
    %2163 = vst.msk [vmem:[#allocation7 + $0x298] sm:$0xff] %vm2080, %v1826
    %2164 = vst [vmem:[#allocation7 + $0x2a0] sm:$0xff] %v1827
    %2165 = vst.msk [vmem:[#allocation7 + $0x2a8] sm:$0xff] %vm2080, %v1828
    %2166 = vst [vmem:[#allocation7 + $0x2b0] sm:$0xff] %v1829
    %2167 = vst.msk [vmem:[#allocation7 + $0x2b8] sm:$0xff] %vm2080, %v1830
    %2168 = vst [vmem:[#allocation7 + $0x2c0] sm:$0xff] %v1831
    %2169 = vst.msk [vmem:[#allocation7 + $0x2c8] sm:$0xff] %vm2080, %v1832
    %2170 = vst [vmem:[#allocation7 + $0x2d0] sm:$0xff] %v1833
    %2171 = vst.msk [vmem:[#allocation7 + $0x2d8] sm:$0xff] %vm2080, %v1834
    %2172 = vst [vmem:[#allocation7 + $0x2e0] sm:$0xff] %v1835
    %2173 = vst.msk [vmem:[#allocation7 + $0x2e8] sm:$0xff] %vm2080, %v1836
    %2174 = vst [vmem:[#allocation7 + $0x2f0] sm:$0xff] %v1837
    %2175 = vst.msk [vmem:[#allocation7 + $0x2f8] sm:$0xff] %vm2080, %v1838
    %2176 = vst [vmem:[#allocation7 + $0x300] sm:$0xff] %v1839
    %2177 = vst.msk [vmem:[#allocation7 + $0x308] sm:$0xff] %vm2080, %v1840
    %2178 = vst [vmem:[#allocation7 + $0x310] sm:$0xff] %v1841
    %2179 = vst.msk [vmem:[#allocation7 + $0x318] sm:$0xff] %vm2080, %v1842
    %2180 = vst [vmem:[#allocation7 + $0x320] sm:$0xff] %v1843
    %2181 = vst.msk [vmem:[#allocation7 + $0x328] sm:$0xff] %vm2080, %v1844
    %2182 = vst [vmem:[#allocation7 + $0x330] sm:$0xff] %v1845
    %2183 = vst.msk [vmem:[#allocation7 + $0x338] sm:$0xff] %vm2080, %v1846
    %2184 = vst [vmem:[#allocation7 + $0x340] sm:$0xff] %v1847
    %2185 = vst.msk [vmem:[#allocation7 + $0x348] sm:$0xff] %vm2080, %v1848
    %2186 = vst [vmem:[#allocation7 + $0x350] sm:$0xff] %v1849
    %2187 = vst.msk [vmem:[#allocation7 + $0x358] sm:$0xff] %vm2080, %v1850
    %2188 = vst [vmem:[#allocation7 + $0x360] sm:$0xff] %v1851
    %2189 = vst.msk [vmem:[#allocation7 + $0x368] sm:$0xff] %vm2080, %v1852
    %2190 = vst [vmem:[#allocation7 + $0x370] sm:$0xff] %v1853
    %2191 = vst.msk [vmem:[#allocation7 + $0x378] sm:$0xff] %vm2080, %v1854
    %2192 = vst [vmem:[#allocation7 + $0x380] sm:$0xff] %v1855
    %2193 = vst.msk [vmem:[#allocation7 + $0x388] sm:$0xff] %vm2080, %v1856
    %2194 = vst [vmem:[#allocation7 + $0x390] sm:$0xff] %v1857
    %2195 = vst.msk [vmem:[#allocation7 + $0x398] sm:$0xff] %vm2080, %v1858
    %2196 = vst [vmem:[#allocation7 + $0x3a0] sm:$0xff] %v1859
    %2197 = vst.msk [vmem:[#allocation7 + $0x3a8] sm:$0xff] %vm2080, %v1860
    %2198 = vst [vmem:[#allocation7 + $0x3b0] sm:$0xff] %v1861
    %2199 = vst.msk [vmem:[#allocation7 + $0x3b8] sm:$0xff] %vm2080, %v1862
    %2200 = vst [vmem:[#allocation7 + $0x3c0] sm:$0xff] %v1863
    %2201 = vst.msk [vmem:[#allocation7 + $0x3c8] sm:$0xff] %vm2080, %v1864
    %2202 = vst [vmem:[#allocation7 + $0x3d0] sm:$0xff] %v1865
    %2203 = vst.msk [vmem:[#allocation7 + $0x3d8] sm:$0xff] %vm2080, %v1866
    %2204 = vst [vmem:[#allocation7 + $0x3e0] sm:$0xff] %v1867
    %2205 = vst.msk [vmem:[#allocation7 + $0x3e8] sm:$0xff] %vm2080, %v1868
    %2206 = vst [vmem:[#allocation7 + $0x3f0] sm:$0xff] %v1869
    %2207 = vst.msk [vmem:[#allocation7 + $0x3f8] sm:$0xff] %vm2080, %v1870
    %2208 = vst [vmem:[#allocation7 + $0x400] sm:$0xff] %v1871
    %2209 = vst.msk [vmem:[#allocation7 + $0x408] sm:$0xff] %vm2080, %v1872
    %2210 = vst [vmem:[#allocation7 + $0x410] sm:$0xff] %v1873
    %2211 = vst.msk [vmem:[#allocation7 + $0x418] sm:$0xff] %vm2080, %v1874
    %2212 = vst [vmem:[#allocation7 + $0x420] sm:$0xff] %v1875
    %2213 = vst.msk [vmem:[#allocation7 + $0x428] sm:$0xff] %vm2080, %v1876
    %2214 = vst [vmem:[#allocation7 + $0x430] sm:$0xff] %v1877
    %2215 = vst.msk [vmem:[#allocation7 + $0x438] sm:$0xff] %vm2080, %v1878
    %2216 = vst [vmem:[#allocation7 + $0x440] sm:$0xff] %v1879
    %2217 = vst.msk [vmem:[#allocation7 + $0x448] sm:$0xff] %vm2080, %v1880
    %2218 = vst [vmem:[#allocation7 + $0x450] sm:$0xff] %v1881
    %2219 = vst.msk [vmem:[#allocation7 + $0x458] sm:$0xff] %vm2080, %v1882
    %2220 = vst [vmem:[#allocation7 + $0x460] sm:$0xff] %v1883
    %2221 = vst.msk [vmem:[#allocation7 + $0x468] sm:$0xff] %vm2080, %v1884
    %2222 = vst [vmem:[#allocation7 + $0x470] sm:$0xff] %v1885
    %2223 = vst.msk [vmem:[#allocation7 + $0x478] sm:$0xff] %vm2080, %v1886
    %2224 = vst [vmem:[#allocation7 + $0x480] sm:$0xff] %v1887
    %2225 = vst.msk [vmem:[#allocation7 + $0x488] sm:$0xff] %vm2080, %v1888
    %2226 = vst [vmem:[#allocation7 + $0x490] sm:$0xff] %v1889
    %2227 = vst.msk [vmem:[#allocation7 + $0x498] sm:$0xff] %vm2080, %v1890
    %2228 = vst [vmem:[#allocation7 + $0x4a0] sm:$0xff] %v1891
    %2229 = vst.msk [vmem:[#allocation7 + $0x4a8] sm:$0xff] %vm2080, %v1892
    %2230 = vst [vmem:[#allocation7 + $0x4b0] sm:$0xff] %v1893
    %2231 = vst.msk [vmem:[#allocation7 + $0x4b8] sm:$0xff] %vm2080, %v1894
    %2232 = vst [vmem:[#allocation7 + $0x4c0] sm:$0xff] %v1895
    %2233 = vst.msk [vmem:[#allocation7 + $0x4c8] sm:$0xff] %vm2080, %v1896
    %2234 = vst [vmem:[#allocation7 + $0x4d0] sm:$0xff] %v1897
    %2235 = vst.msk [vmem:[#allocation7 + $0x4d8] sm:$0xff] %vm2080, %v1898
    %2236 = vst [vmem:[#allocation7 + $0x4e0] sm:$0xff] %v1899
    %2237 = vst.msk [vmem:[#allocation7 + $0x4e8] sm:$0xff] %vm2080, %v1900
    %2238 = vst [vmem:[#allocation7 + $0x4f0] sm:$0xff] %v1901
    %2239 = vst.msk [vmem:[#allocation7 + $0x4f8] sm:$0xff] %vm2080, %v1902
    %2240 = vst [vmem:[#allocation7 + $0x500] sm:$0xff] %v1903
    %2241 = vst.msk [vmem:[#allocation7 + $0x508] sm:$0xff] %vm2080, %v1904
    %2242 = vst [vmem:[#allocation7 + $0x510] sm:$0xff] %v1905
    %2243 = vst.msk [vmem:[#allocation7 + $0x518] sm:$0xff] %vm2080, %v1906
    %2244 = vst [vmem:[#allocation7 + $0x520] sm:$0xff] %v1907
    %2245 = vst.msk [vmem:[#allocation7 + $0x528] sm:$0xff] %vm2080, %v1908
    %2246 = vst [vmem:[#allocation7 + $0x530] sm:$0xff] %v1909
    %2247 = vst.msk [vmem:[#allocation7 + $0x538] sm:$0xff] %vm2080, %v1910
    %2248 = vst [vmem:[#allocation7 + $0x540] sm:$0xff] %v1911
    %2249 = vst.msk [vmem:[#allocation7 + $0x548] sm:$0xff] %vm2080, %v1912
    %2250 = vst [vmem:[#allocation7 + $0x550] sm:$0xff] %v1913
    %2251 = vst.msk [vmem:[#allocation7 + $0x558] sm:$0xff] %vm2080, %v1914
    %2252 = vst [vmem:[#allocation7 + $0x560] sm:$0xff] %v1915
    %2253 = vst.msk [vmem:[#allocation7 + $0x568] sm:$0xff] %vm2080, %v1916
    %2254 = vst [vmem:[#allocation7 + $0x570] sm:$0xff] %v1917
    %2255 = vst.msk [vmem:[#allocation7 + $0x578] sm:$0xff] %vm2080, %v1918
    %2256 = vst [vmem:[#allocation7 + $0x580] sm:$0xff] %v1919
    %2257 = vst.msk [vmem:[#allocation7 + $0x588] sm:$0xff] %vm2080, %v1920
    %2258 = vst [vmem:[#allocation7 + $0x590] sm:$0xff] %v1921
    %2259 = vst.msk [vmem:[#allocation7 + $0x598] sm:$0xff] %vm2080, %v1922
    %2260 = vst [vmem:[#allocation7 + $0x5a0] sm:$0xff] %v1923
    %2261 = vst.msk [vmem:[#allocation7 + $0x5a8] sm:$0xff] %vm2080, %v1924
    %2262 = vst [vmem:[#allocation7 + $0x5b0] sm:$0xff] %v1925
    %2263 = vst.msk [vmem:[#allocation7 + $0x5b8] sm:$0xff] %vm2080, %v1926
    %2264 = vst [vmem:[#allocation7 + $0x5c0] sm:$0xff] %v1927
    %2265 = vst.msk [vmem:[#allocation7 + $0x5c8] sm:$0xff] %vm2080, %v1928
    %2266 = vst [vmem:[#allocation7 + $0x5d0] sm:$0xff] %v1929
    %2267 = vst.msk [vmem:[#allocation7 + $0x5d8] sm:$0xff] %vm2080, %v1930
    %2268 = vst [vmem:[#allocation7 + $0x5e0] sm:$0xff] %v1931
    %2269 = vst.msk [vmem:[#allocation7 + $0x5e8] sm:$0xff] %vm2080, %v1932
    %2270 = vst [vmem:[#allocation7 + $0x5f0] sm:$0xff] %v1933
    %2271 = vst.msk [vmem:[#allocation7 + $0x5f8] sm:$0xff] %vm2080, %v1934
    %2272 = vst [vmem:[#allocation7 + $0x600] sm:$0xff] %v1935
    %2273 = vst.msk [vmem:[#allocation7 + $0x608] sm:$0xff] %vm2080, %v1936
    %2274 = vst [vmem:[#allocation7 + $0x610] sm:$0xff] %v1937
    %2275 = vst.msk [vmem:[#allocation7 + $0x618] sm:$0xff] %vm2080, %v1938
    %2276 = vst [vmem:[#allocation7 + $0x620] sm:$0xff] %v1939
    %2277 = vst.msk [vmem:[#allocation7 + $0x628] sm:$0xff] %vm2080, %v1940
    %2278 = vst [vmem:[#allocation7 + $0x630] sm:$0xff] %v1941
    %2279 = vst.msk [vmem:[#allocation7 + $0x638] sm:$0xff] %vm2080, %v1942
    %2280 = vst [vmem:[#allocation7 + $0x640] sm:$0xff] %v1943
    %2281 = vst.msk [vmem:[#allocation7 + $0x648] sm:$0xff] %vm2080, %v1944
    %2282 = vst [vmem:[#allocation7 + $0x650] sm:$0xff] %v1945
    %2283 = vst.msk [vmem:[#allocation7 + $0x658] sm:$0xff] %vm2080, %v1946
    %2284 = vst [vmem:[#allocation7 + $0x660] sm:$0xff] %v1947
    %2285 = vst.msk [vmem:[#allocation7 + $0x668] sm:$0xff] %vm2080, %v1948
    %2286 = vst [vmem:[#allocation7 + $0x670] sm:$0xff] %v1949
    %2287 = vst.msk [vmem:[#allocation7 + $0x678] sm:$0xff] %vm2080, %v1950
    %2288 = vst [vmem:[#allocation7 + $0x680] sm:$0xff] %v1951
    %2289 = vst.msk [vmem:[#allocation7 + $0x688] sm:$0xff] %vm2080, %v1952
    %2290 = vst [vmem:[#allocation7 + $0x690] sm:$0xff] %v1953
    %2291 = vst.msk [vmem:[#allocation7 + $0x698] sm:$0xff] %vm2080, %v1954
    %2292 = vst [vmem:[#allocation7 + $0x6a0] sm:$0xff] %v1955
    %2293 = vst.msk [vmem:[#allocation7 + $0x6a8] sm:$0xff] %vm2080, %v1956
    %2294 = vst [vmem:[#allocation7 + $0x6b0] sm:$0xff] %v1957
    %2295 = vst.msk [vmem:[#allocation7 + $0x6b8] sm:$0xff] %vm2080, %v1958
    %2296 = vst [vmem:[#allocation7 + $0x6c0] sm:$0xff] %v1959
    %2297 = vst.msk [vmem:[#allocation7 + $0x6c8] sm:$0xff] %vm2080, %v1960
    %2298 = vst [vmem:[#allocation7 + $0x6d0] sm:$0xff] %v1961
    %2299 = vst.msk [vmem:[#allocation7 + $0x6d8] sm:$0xff] %vm2080, %v1962
    %2300 = vst [vmem:[#allocation7 + $0x6e0] sm:$0xff] %v1963
    %2301 = vst.msk [vmem:[#allocation7 + $0x6e8] sm:$0xff] %vm2080, %v1964
    %2302 = vst [vmem:[#allocation7 + $0x6f0] sm:$0xff] %v1965
    %2303 = vst.msk [vmem:[#allocation7 + $0x6f8] sm:$0xff] %vm2080, %v1966
    %2304 = vst [vmem:[#allocation7 + $0x700] sm:$0xff] %v1967
    %2305 = vst.msk [vmem:[#allocation7 + $0x708] sm:$0xff] %vm2080, %v1968
    %2306 = vst [vmem:[#allocation7 + $0x710] sm:$0xff] %v1969
    %2307 = vst.msk [vmem:[#allocation7 + $0x718] sm:$0xff] %vm2080, %v1970
    %2308 = vst [vmem:[#allocation7 + $0x720] sm:$0xff] %v1971
    %2309 = vst.msk [vmem:[#allocation7 + $0x728] sm:$0xff] %vm2080, %v1972
    %2310 = vst [vmem:[#allocation7 + $0x730] sm:$0xff] %v1973
    %2311 = vst.msk [vmem:[#allocation7 + $0x738] sm:$0xff] %vm2080, %v1974
    %2312 = vst [vmem:[#allocation7 + $0x740] sm:$0xff] %v1975
    %2313 = vst.msk [vmem:[#allocation7 + $0x748] sm:$0xff] %vm2080, %v1976
    %2314 = vst [vmem:[#allocation7 + $0x750] sm:$0xff] %v1977
    %2315 = vst.msk [vmem:[#allocation7 + $0x758] sm:$0xff] %vm2080, %v1978
    %2316 = vst [vmem:[#allocation7 + $0x760] sm:$0xff] %v1979
    %2317 = vst.msk [vmem:[#allocation7 + $0x768] sm:$0xff] %vm2080, %v1980
    %2318 = vst [vmem:[#allocation7 + $0x770] sm:$0xff] %v1981
    %2319 = vst.msk [vmem:[#allocation7 + $0x778] sm:$0xff] %vm2080, %v1982
    %2320 = vst [vmem:[#allocation7 + $0x780] sm:$0xff] %v1983
    %2321 = vst.msk [vmem:[#allocation7 + $0x788] sm:$0xff] %vm2080, %v1984
    %2322 = vst [vmem:[#allocation7 + $0x790] sm:$0xff] %v1985
    %2323 = vst.msk [vmem:[#allocation7 + $0x798] sm:$0xff] %vm2080, %v1986
    %2324 = vst [vmem:[#allocation7 + $0x7a0] sm:$0xff] %v1987
    %2325 = vst.msk [vmem:[#allocation7 + $0x7a8] sm:$0xff] %vm2080, %v1988
    %2326 = vst [vmem:[#allocation7 + $0x7b0] sm:$0xff] %v1989
    %2327 = vst.msk [vmem:[#allocation7 + $0x7b8] sm:$0xff] %vm2080, %v1990
    %2328 = vst [vmem:[#allocation7 + $0x7c0] sm:$0xff] %v1991
    %2329 = vst.msk [vmem:[#allocation7 + $0x7c8] sm:$0xff] %vm2080, %v1992
    %2330 = vst [vmem:[#allocation7 + $0x7d0] sm:$0xff] %v1993
    %2331 = vst.msk [vmem:[#allocation7 + $0x7d8] sm:$0xff] %vm2080, %v1994
    %2332 = vst [vmem:[#allocation7 + $0x7e0] sm:$0xff] %v1995
    %2333 = vst.msk [vmem:[#allocation7 + $0x7e8] sm:$0xff] %vm2080, %v1996
    %2334 = vst [vmem:[#allocation7 + $0x7f0] sm:$0xff] %v1997
    %2335 = vst.msk [vmem:[#allocation7 + $0x7f8] sm:$0xff] %vm2080, %v1998
    %2336 = vst [vmem:[#allocation7 + $0x800] sm:$0xff] %v1999
    %2337 = vst.msk [vmem:[#allocation7 + $0x808] sm:$0xff] %vm2080, %v2000
    %2338 = vst [vmem:[#allocation7 + $0x810] sm:$0xff] %v2001
    %2339 = vst.msk [vmem:[#allocation7 + $0x818] sm:$0xff] %vm2080, %v2002
    %2340 = vst [vmem:[#allocation7 + $0x820] sm:$0xff] %v2003
    %2341 = vst.msk [vmem:[#allocation7 + $0x828] sm:$0xff] %vm2080, %v2004
    %2342 = vst [vmem:[#allocation7 + $0x830] sm:$0xff] %v2005
    %2343 = vst.msk [vmem:[#allocation7 + $0x838] sm:$0xff] %vm2080, %v2006
    %2344 = vst [vmem:[#allocation7 + $0x840] sm:$0xff] %v2007
    %2345 = vst.msk [vmem:[#allocation7 + $0x848] sm:$0xff] %vm2080, %v2008
    %2346 = vst [vmem:[#allocation7 + $0x850] sm:$0xff] %v2009
    %2347 = vst.msk [vmem:[#allocation7 + $0x858] sm:$0xff] %vm2080, %v2010
    %2348 = vst [vmem:[#allocation7 + $0x860] sm:$0xff] %v2011
    %2349 = vst.msk [vmem:[#allocation7 + $0x868] sm:$0xff] %vm2080, %v2012
    %2350 = vst [vmem:[#allocation7 + $0x870] sm:$0xff] %v2013
    %2351 = vst.msk [vmem:[#allocation7 + $0x878] sm:$0xff] %vm2080, %v2014
    %2352 = vst [vmem:[#allocation7 + $0x880] sm:$0xff] %v2015
    %2353 = vst.msk [vmem:[#allocation7 + $0x888] sm:$0xff] %vm2080, %v2016
    %2354 = vst [vmem:[#allocation7 + $0x890] sm:$0xff] %v2017
    %2355 = vst.msk [vmem:[#allocation7 + $0x898] sm:$0xff] %vm2080, %v2018
    %2356 = vst [vmem:[#allocation7 + $0x8a0] sm:$0xff] %v2019
    %2357 = vst.msk [vmem:[#allocation7 + $0x8a8] sm:$0xff] %vm2080, %v2020
    %2358 = vst [vmem:[#allocation7 + $0x8b0] sm:$0xff] %v2021
    %2359 = vst.msk [vmem:[#allocation7 + $0x8b8] sm:$0xff] %vm2080, %v2022
    %2360 = vst [vmem:[#allocation7 + $0x8c0] sm:$0xff] %v2023
    %2361 = vst.msk [vmem:[#allocation7 + $0x8c8] sm:$0xff] %vm2080, %v2024
    %2362 = vst [vmem:[#allocation7 + $0x8d0] sm:$0xff] %v2025
    %2363 = vst.msk [vmem:[#allocation7 + $0x8d8] sm:$0xff] %vm2080, %v2026
    %2364 = vst [vmem:[#allocation7 + $0x8e0] sm:$0xff] %v2027
    %2365 = vst.msk [vmem:[#allocation7 + $0x8e8] sm:$0xff] %vm2080, %v2028
    %2366 = vst [vmem:[#allocation7 + $0x8f0] sm:$0xff] %v2029
    %2367 = vst.msk [vmem:[#allocation7 + $0x8f8] sm:$0xff] %vm2080, %v2030
    %2368 = vst [vmem:[#allocation7 + $0x900] sm:$0xff] %v2031
    %2369 = vst.msk [vmem:[#allocation7 + $0x908] sm:$0xff] %vm2080, %v2032
    %2370 = vst [vmem:[#allocation7 + $0x910] sm:$0xff] %v2033
    %2371 = vst.msk [vmem:[#allocation7 + $0x918] sm:$0xff] %vm2080, %v2034
    %2372 = vst [vmem:[#allocation7 + $0x920] sm:$0xff] %v2035
    %2373 = vst.msk [vmem:[#allocation7 + $0x928] sm:$0xff] %vm2080, %v2036
    %2374 = vst [vmem:[#allocation7 + $0x930] sm:$0xff] %v2037
    %2375 = vst.msk [vmem:[#allocation7 + $0x938] sm:$0xff] %vm2080, %v2038
    %2376 = vst [vmem:[#allocation7 + $0x940] sm:$0xff] %v2039
    %2377 = vst.msk [vmem:[#allocation7 + $0x948] sm:$0xff] %vm2080, %v2040
    %2378 = vst [vmem:[#allocation7 + $0x950] sm:$0xff] %v2041
    %2379 = vst.msk [vmem:[#allocation7 + $0x958] sm:$0xff] %vm2080, %v2042
    %2380 = vst [vmem:[#allocation7 + $0x960] sm:$0xff] %v2043
    %2381 = vst.msk [vmem:[#allocation7 + $0x968] sm:$0xff] %vm2080, %v2044
    %2382 = vst [vmem:[#allocation7 + $0x970] sm:$0xff] %v2045
    %2383 = vst.msk [vmem:[#allocation7 + $0x978] sm:$0xff] %vm2080, %v2046
    %2384 = vst [vmem:[#allocation7 + $0x980] sm:$0xff] %v2047
    %2385 = vst.msk [vmem:[#allocation7 + $0x988] sm:$0xff] %vm2080, %v2048
    %2386 = vst [vmem:[#allocation7 + $0x990] sm:$0xff] %v2049
    %2387 = vst.msk [vmem:[#allocation7 + $0x998] sm:$0xff] %vm2080, %v2050
    %2388 = vst [vmem:[#allocation7 + $0x9a0] sm:$0xff] %v2051
    %2389 = vst.msk [vmem:[#allocation7 + $0x9a8] sm:$0xff] %vm2080, %v2052
    %2390 = vst [vmem:[#allocation7 + $0x9b0] sm:$0xff] %v2053
    %2391 = vst.msk [vmem:[#allocation7 + $0x9b8] sm:$0xff] %vm2080, %v2054
    %2392 = vst [vmem:[#allocation7 + $0x9c0] sm:$0xff] %v2055
    %2393 = vst.msk [vmem:[#allocation7 + $0x9c8] sm:$0xff] %vm2080, %v2056
    %2394 = vst [vmem:[#allocation7 + $0x9d0] sm:$0xff] %v2057
    %2395 = vst.msk [vmem:[#allocation7 + $0x9d8] sm:$0xff] %vm2080, %v2058
    %2396 = vst [vmem:[#allocation7 + $0x9e0] sm:$0xff] %v2059
    %2397 = vst.msk [vmem:[#allocation7 + $0x9e8] sm:$0xff] %vm2080, %v2060
    %2398 = vst [vmem:[#allocation7 + $0x9f0] sm:$0xff] %v2061
    %2399 = vst.msk [vmem:[#allocation7 + $0x9f8] sm:$0xff] %vm2080, %v2062
    %2400 = vst [vmem:[#allocation7 + $0xa00] sm:$0xff] %v2063
    %2401 = vst.msk [vmem:[#allocation7 + $0xa08] sm:$0xff] %vm2080, %v2064
    %2402 = vst [vmem:[#allocation7 + $0xa10] sm:$0xff] %v2065
    %2403 = vst.msk [vmem:[#allocation7 + $0xa18] sm:$0xff] %vm2080, %v2066
    %2404 = vst [vmem:[#allocation7 + $0xa20] sm:$0xff] %v2067
    %2405 = vst.msk [vmem:[#allocation7 + $0xa28] sm:$0xff] %vm2080, %v2068
    %2406 = vst [vmem:[#allocation7 + $0xa30] sm:$0xff] %v2069
    %2407 = vst.msk [vmem:[#allocation7 + $0xa38] sm:$0xff] %vm2080, %v2070
    %2408 = vst [vmem:[#allocation7 + $0xa40] sm:$0xff] %v2071
    %2409 = vst.msk [vmem:[#allocation7 + $0xa48] sm:$0xff] %vm2080, %v2072
    %2410 = vst [vmem:[#allocation7 + $0xa50] sm:$0xff] %v2073
    %2411 = vst.msk [vmem:[#allocation7 + $0xa58] sm:$0xff] %vm2080, %v2074
    %2412 = vst [vmem:[#allocation7 + $0xa60] sm:$0xff] %v2075
    %2413 = vst.msk [vmem:[#allocation7 + $0xa68] sm:$0xff] %vm2080, %v2076
    %2414 = vst [vmem:[#allocation7 + $0xa70] sm:$0xff] %v2077
    %2415 = vst.msk [vmem:[#allocation7 + $0xa78] sm:$0xff] %vm2080, %v2078
    // Predicated region
    $region22: #{tpu_custom_call.1} parent=1 // pred_check
      _
    $region23: #{tpu_custom_call.1} parent=1 // pred_check_branch
      %2417 = sbr.rel (0) target = $region25
    $region24: #{tpu_custom_call.1} parent=1 // pred_region
      %s2419 = ssub.s32 43008, 43008
      %2420 = vsyncadd [#allocation4], %s2419
      %s2421 = sshll.u32 [#allocation7], 4
      %s2422 = int_to_ptr.vmem [resolvable:$true] %s2421
      %2427 = dma.vmem_to_hbm [thread:$0]  %s2422, 43008, %s3, [#allocation4], 256, 256, 16
    $region25: #{tpu_custom_call.1} parent=1 // pred_fallthru
      _
    // Predicated region
    $region26: #{tpu_custom_call.1} parent=1 // pred_check
      _
    $region27: #{tpu_custom_call.1} parent=1 // pred_check_branch
      %2429 = sbr.rel (0) target = $region29
    $region28: #{tpu_custom_call.1} parent=1 // pred_region
      %2430 = dma.done [#allocation4], 43008
    $region29: #{tpu_custom_call.1} parent=1 // pred_fallthru
      _
    %2431 = vsyncpa [#allocation3], 1
    %2432 = vsyncpa [#allocation6], 1
    %2433 = vsyncpa [#allocation4], 1

</llo_original>
